<compile_context>
chip_gen: v7x
topology: tpu7x:2x2x1
jax: 0.10.0
libtpu: 0.0.40
codegen_flags: <defaults>
</compile_context>

<pallas_src>
import functools

import jax
import jax.numpy as jnp
import numpy as np
from jax.experimental import pallas as pl
from jax.experimental.pallas import tpu as pltpu


# ----------------------------- fused kernel ---------------------------------
def gcn_lstm_kernel(tok_ref, ew_ref, whh_ref, adj_ref,
                    w1_ref, b1_ref, w2_ref, b2_ref, o_ref, xp_ref):
    n_nodes, seq_len = tok_ref.shape
    ntok_pad = ew_ref.shape[0]
    hidden = whh_ref.shape[0]
    DEF = jax.lax.Precision.DEFAULT

    # ---- fused embedding gather + LSTM input projection: onehot(tokens) @ E' ----
    tok = tok_ref[...]                                                  # (N, SEQ) int32
    col_iota = jax.lax.broadcasted_iota(jnp.int32, (n_nodes, ntok_pad), 1)
    # time-major one-hot: row block t holds node n's token at step t
    onehot = jnp.concatenate(
        [(tok[:, t:t + 1] == col_iota).astype(jnp.float32) for t in range(seq_len)],
        axis=0)                                                         # (SEQ*N, NTOK_PAD)
    xp_ref[...] = jnp.dot(onehot, ew_ref[...], precision=DEF,
                          preferred_element_type=jnp.float32)           # (SEQ*N, 4H)

    # ---- LSTM recurrence (SEQ small & static -> trace-time unroll) ----
    whh = whh_ref[...]                                                  # (H, 4H), g cols pre-scaled x2
    h = jnp.zeros((n_nodes, hidden), jnp.float32)
    c = jnp.zeros((n_nodes, hidden), jnp.float32)
    for t in range(seq_len):
        gates = xp_ref[t * n_nodes:(t + 1) * n_nodes, :] + jnp.dot(
            h, whh, precision=DEF, preferred_element_type=jnp.float32)  # (N, 4H): i | f | o | 2*g
        sg = jax.nn.sigmoid(gates)                                      # ONE full-slab EUP op
        i_t = sg[:, :hidden]
        f_t = sg[:, hidden:2 * hidden]
        o_t = sg[:, 2 * hidden:3 * hidden]
        g_t = 2.0 * sg[:, 3 * hidden:] - 1.0                            # tanh(z) = 2*sigmoid(2z) - 1
        c = f_t * c + i_t * g_t
        h = o_t * jnp.tanh(c)
    # h == final_hidden_state[-1]

    # ---- GraphConv 1 + ReLU; nn.Dropout(p=0.5) is identity at inference ----
    adj = adj_ref[...]
    h1 = jnp.dot(adj,
                 jnp.dot(h, w1_ref[...], precision=DEF, preferred_element_type=jnp.float32),
                 precision=DEF, preferred_element_type=jnp.float32) + b1_ref[...]
    h1 = jnp.maximum(h1, 0.0)

    # ---- GraphConv 2 (output feature dim zero-padded to 128 lanes by the wrapper) ----
    h2 = jnp.dot(adj,
                 jnp.dot(h1, w2_ref[...], precision=DEF, preferred_element_type=jnp.float32),
                 precision=DEF, preferred_element_type=jnp.float32) + b2_ref[...]
    o_ref[...] = h2.astype(o_ref.dtype)


# ------------------------------ full forward ---------------------------------
@functools.partial(jax.jit, static_argnames=("n_classes",))
def gcn_lstm_forward(params, adj_hat, tokens, n_classes):
    n_nodes, seq_len = tokens.shape
    four_h = params["w_hh_t"].shape[1]
    out_pad = params["w_gc2_pad"].shape[1]

    inputs = (tokens.astype(jnp.int32), params["ew_pad"], params["w_hh_t"], adj_hat,
              params["w_gc1"], params["b_gc1"], params["w_gc2_pad"], params["b_gc2_pad"])

    def full(a):  # full-array VMEM block (grid-less single invocation)
        return pl.BlockSpec(a.shape, lambda: (0,) * a.ndim)

    out = pl.pallas_call(
        gcn_lstm_kernel,
        out_shape=jax.ShapeDtypeStruct((n_nodes, out_pad), jnp.float32),
        in_specs=[full(a) for a in inputs],
        out_specs=pl.BlockSpec((n_nodes, out_pad), lambda: (0, 0)),
        scratch_shapes=[pltpu.VMEM((seq_len * n_nodes, four_h), jnp.float32)],
    )(*inputs)
    return out[:, :n_classes]


# --------------------- float64 numpy reference (torch semantics) -------------
def _ref_forward(emb, w_ih, w_hh, b_ih, b_hh, w1, b1, w2, b2, adj, tokens):
    emb, w_ih, w_hh, b_ih, b_hh, w1, b1, w2, b2, adj = [
        np.asarray(a, np.float64)
        for a in (emb, w_ih, w_hh, b_ih, b_hh, w1, b1, w2, b2, adj)]
    x = emb[np.asarray(tokens)]               # (N, SEQ, IN)
    x = np.transpose(x, (1, 0, 2))            # (SEQ, N, IN)
    n = x.shape[1]
    hdim = w_hh.shape[1]
    hid = np.zeros((n, hdim)); cell = np.zeros((n, hdim))
    sig = lambda z: 1.0 / (1.0 + np.exp(-z))
    for t in range(x.shape[0]):
        gates = x[t] @ w_ih.T + hid @ w_hh.T + b_ih + b_hh   # cols i,f,g,o
        i = sig(gates[:, :hdim]); f = sig(gates[:, hdim:2 * hdim])
        g = np.tanh(gates[:, 2 * hdim:3 * hdim]); o = sig(gates[:, 3 * hdim:])
        cell = f * cell + i * g
        hid = o * np.tanh(cell)
    h1 = np.maximum(adj @ (hid @ w1) + b1, 0.0)
    return adj @ (h1 @ w2) + b2


if __name__ == "__main__":
    N = 16           # graph nodes (== batch of node texts)
    SEQ = 8          # sequence length of each node's text
    N_TOKENS = 50
    IN_FEATS = 32    # embedding dim
    LSTM_H = 64      # fixed by the module: self.lstm_hidden_size = 64
    N_HIDDEN = 64
    N_CLASSES = 8
    PAD_IX = 0
    NTOK_PAD = 64    # E' rows padded 50 -> 64 (MXU K dim / sublane multiple)
    OUT_PAD = 128    # lane-dense padded output width

    key = jax.random.PRNGKey(0)
    ks = jax.random.split(key, 10)

    # Synthetic graph: random symmetric adjacency + self-loops, sym-normalized
    # (DGL GraphConv norm='both').
    a = (jax.random.uniform(ks[0], (N, N)) < 0.3).astype(jnp.float32)
    a = jnp.maximum(a, a.T)
    a = jnp.where(jnp.eye(N, dtype=bool), 1.0, a)
    d_inv_sqrt = 1.0 / jnp.sqrt(a.sum(axis=1))
    adj_hat = d_inv_sqrt[:, None] * a * d_inv_sqrt[None, :]

    # Deterministic parameter init (shapes from __init__), PyTorch layouts.
    emb = jax.random.normal(ks[1], (N_TOKENS, IN_FEATS), jnp.float32) * 0.1
    emb = emb.at[PAD_IX].set(0.0)                    # padding_idx row zeroed

    scale = 1.0 / jnp.sqrt(jnp.float32(LSTM_H))
    w_ih = jax.random.uniform(ks[2], (4 * LSTM_H, IN_FEATS), minval=-scale, maxval=scale)
    w_hh = jax.random.uniform(ks[3], (4 * LSTM_H, LSTM_H), minval=-scale, maxval=scale)
    b_ih = jax.random.uniform(ks[4], (4 * LSTM_H,), minval=-scale, maxval=scale)
    b_hh = jax.random.uniform(ks[5], (4 * LSTM_H,), minval=-scale, maxval=scale)

    w_gc1 = jax.random.normal(ks[6], (LSTM_H, N_HIDDEN), jnp.float32) * 0.1
    b_gc1 = jnp.zeros((N_HIDDEN,), jnp.float32)
    w_gc2 = jax.random.normal(ks[7], (N_HIDDEN, N_CLASSES), jnp.float32) * 0.1
    b_gc2 = jnp.zeros((N_CLASSES,), jnp.float32)

    tokens = jax.random.randint(ks[8], (N, SEQ), 0, N_TOKENS)

    # -------- offline parameter folding (done once, in float64 numpy) --------
    # PyTorch row order (i,f,g,o) -> kernel column order (i,f,o,g); fold W_ih and
    # both biases into the embedding table (E' = emb @ W_ih^T + b); pre-scale the
    # g columns of E' and W_hh by 2 so tanh(z) == 2*sigmoid(2z) - 1 in-kernel.
    H = LSTM_H
    perm = np.concatenate([np.arange(0, H), np.arange(H, 2 * H),
                           np.arange(3 * H, 4 * H), np.arange(2 * H, 3 * H)])
    emb64 = np.asarray(emb, np.float64)
    w_ih64 = np.asarray(w_ih, np.float64)[perm]              # (4H, IN)
    w_hh64 = np.asarray(w_hh, np.float64)[perm]              # (4H, H)
    b64 = (np.asarray(b_ih, np.float64) + np.asarray(b_hh, np.float64))[perm]

    ew = emb64 @ w_ih64.T + b64                              # (N_TOKENS, 4H)
    ew[:, 3 * H:] *= 2.0                                     # g columns x2
    ew_pad = np.zeros((NTOK_PAD, 4 * H), np.float32)
    ew_pad[:N_TOKENS] = ew                                   # padded rows never indexed

    w_hh_t = w_hh64.T.copy()                                 # (H, 4H)
    w_hh_t[:, 3 * H:] *= 2.0                                 # g columns x2

    params = dict(
        ew_pad=jnp.asarray(ew_pad),
        w_hh_t=jnp.asarray(w_hh_t, dtype=jnp.float32),
        w_gc1=w_gc1,
        b_gc1=b_gc1.reshape(1, -1),
        w_gc2_pad=jnp.pad(w_gc2, ((0, 0), (0, OUT_PAD - N_CLASSES))),   # (H, 128)
        b_gc2_pad=jnp.pad(b_gc2, (0, OUT_PAD - N_CLASSES)).reshape(1, -1),
    )

    out = gcn_lstm_forward(params, adj_hat, tokens, n_classes=N_CLASSES)
    out = jax.block_until_ready(out)
    assert out.shape == (N, N_CLASSES) and out.dtype == jnp.float32

    # Correctness check against a float64 numpy reference in the original gate order.
    # Tolerance reflects single-pass bf16 MXU matmuls under default precision plus
    # the offline-folded (f32-rounded) E' table.
    ref = _ref_forward(emb, w_ih, w_hh, b_ih, b_hh, w_gc1, b_gc1, w_gc2, b_gc2,
                       adj_hat, tokens)
    assert np.allclose(np.asarray(out), ref, atol=5e-4, rtol=5e-4)

    # TODO(synk): fc1/fc2 are only used by forward_text() (graph_freeze path); not exercised here.
    print("KERNEL_OK")
</pallas_src>

<mosaic_0001>
module attributes {stable_mosaic.version = 11 : i64} {
  func.func @gcn_lstm_kernel(%arg0: memref<16x8xi32, #tpu.memory_space<vmem>>, %arg1: memref<64x256xf32, #tpu.memory_space<vmem>>, %arg2: memref<64x256xf32, #tpu.memory_space<vmem>>, %arg3: memref<16x16xf32, #tpu.memory_space<vmem>>, %arg4: memref<64x64xf32, #tpu.memory_space<vmem>>, %arg5: memref<1x64xf32, #tpu.memory_space<vmem>>, %arg6: memref<64x128xf32, #tpu.memory_space<vmem>>, %arg7: memref<1x128xf32, #tpu.memory_space<vmem>>, %arg8: memref<16x128xf32, #tpu.memory_space<vmem>>, %arg9: memref<128x256xf32, #tpu.memory_space<vmem>>) attributes {dimension_semantics = [], scalar_prefetch = 0 : i64, scratch_operands = 1 : i64, tpu.core_type = #tpu.core_type<tc>} {
    %c0 = arith.constant 0 : index
    %c0_0 = arith.constant 0 : index
    %0 = vector.load %arg0[%c0, %c0_0] : memref<16x8xi32, #tpu.memory_space<vmem>>, vector<16x8xi32>
    %1 = tpu.iota {dimensions = array<i32: 1>} : vector<16x64xi32>
    %2 = vector.extract_strided_slice %0 {offsets = [0, 0], sizes = [16, 1], strides = [1, 1]} : vector<16x8xi32> to vector<16x1xi32>
    %3 = vector.broadcast %2 : vector<16x1xi32> to vector<16x64xi32>
    %4 = arith.cmpi eq, %3, %1 : vector<16x64xi32>
    %5 = arith.extui %4 : vector<16x64xi1> to vector<16x64xi32>
    %6 = arith.sitofp %5 : vector<16x64xi32> to vector<16x64xf32>
    %7 = vector.extract_strided_slice %0 {offsets = [0, 1], sizes = [16, 1], strides = [1, 1]} : vector<16x8xi32> to vector<16x1xi32>
    %8 = vector.broadcast %7 : vector<16x1xi32> to vector<16x64xi32>
    %9 = arith.cmpi eq, %8, %1 : vector<16x64xi32>
    %10 = arith.extui %9 : vector<16x64xi1> to vector<16x64xi32>
    %11 = arith.sitofp %10 : vector<16x64xi32> to vector<16x64xf32>
    %12 = vector.extract_strided_slice %0 {offsets = [0, 2], sizes = [16, 1], strides = [1, 1]} : vector<16x8xi32> to vector<16x1xi32>
    %13 = vector.broadcast %12 : vector<16x1xi32> to vector<16x64xi32>
    %14 = arith.cmpi eq, %13, %1 : vector<16x64xi32>
    %15 = arith.extui %14 : vector<16x64xi1> to vector<16x64xi32>
    %16 = arith.sitofp %15 : vector<16x64xi32> to vector<16x64xf32>
    %17 = vector.extract_strided_slice %0 {offsets = [0, 3], sizes = [16, 1], strides = [1, 1]} : vector<16x8xi32> to vector<16x1xi32>
    %18 = vector.broadcast %17 : vector<16x1xi32> to vector<16x64xi32>
    %19 = arith.cmpi eq, %18, %1 : vector<16x64xi32>
    %20 = arith.extui %19 : vector<16x64xi1> to vector<16x64xi32>
    %21 = arith.sitofp %20 : vector<16x64xi32> to vector<16x64xf32>
    %22 = vector.extract_strided_slice %0 {offsets = [0, 4], sizes = [16, 1], strides = [1, 1]} : vector<16x8xi32> to vector<16x1xi32>
    %23 = vector.broadcast %22 : vector<16x1xi32> to vector<16x64xi32>
    %24 = arith.cmpi eq, %23, %1 : vector<16x64xi32>
    %25 = arith.extui %24 : vector<16x64xi1> to vector<16x64xi32>
    %26 = arith.sitofp %25 : vector<16x64xi32> to vector<16x64xf32>
    %27 = vector.extract_strided_slice %0 {offsets = [0, 5], sizes = [16, 1], strides = [1, 1]} : vector<16x8xi32> to vector<16x1xi32>
    %28 = vector.broadcast %27 : vector<16x1xi32> to vector<16x64xi32>
    %29 = arith.cmpi eq, %28, %1 : vector<16x64xi32>
    %30 = arith.extui %29 : vector<16x64xi1> to vector<16x64xi32>
    %31 = arith.sitofp %30 : vector<16x64xi32> to vector<16x64xf32>
    %32 = vector.extract_strided_slice %0 {offsets = [0, 6], sizes = [16, 1], strides = [1, 1]} : vector<16x8xi32> to vector<16x1xi32>
    %33 = vector.broadcast %32 : vector<16x1xi32> to vector<16x64xi32>
    %34 = arith.cmpi eq, %33, %1 : vector<16x64xi32>
    %35 = arith.extui %34 : vector<16x64xi1> to vector<16x64xi32>
    %36 = arith.sitofp %35 : vector<16x64xi32> to vector<16x64xf32>
    %37 = vector.extract_strided_slice %0 {offsets = [0, 7], sizes = [16, 1], strides = [1, 1]} : vector<16x8xi32> to vector<16x1xi32>
    %38 = vector.broadcast %37 : vector<16x1xi32> to vector<16x64xi32>
    %39 = arith.cmpi eq, %38, %1 : vector<16x64xi32>
    %40 = arith.extui %39 : vector<16x64xi1> to vector<16x64xi32>
    %41 = arith.sitofp %40 : vector<16x64xi32> to vector<16x64xf32>
    %42 = tpu.concatenate %6, %11, %16, %21, %26, %31, %36, %41 in 0 : vector<16x64xf32>, vector<16x64xf32>, vector<16x64xf32>, vector<16x64xf32>, vector<16x64xf32>, vector<16x64xf32>, vector<16x64xf32>, vector<16x64xf32> -> vector<128x64xf32>
    %c0_1 = arith.constant 0 : index
    %c0_2 = arith.constant 0 : index
    %43 = vector.load %arg1[%c0_1, %c0_2] : memref<64x256xf32, #tpu.memory_space<vmem>>, vector<64x256xf32>
    %cst = arith.constant dense<0.000000e+00> : vector<128x256xf32>
    %44 = tpu.matmul %42, %43, %cst {dimension_numbers = #tpu.dot_dimension_numbers<[1], [0], [0], [1], [0, 0, 1, 1], [], []>} : vector<128x64xf32>, vector<64x256xf32>, vector<128x256xf32> -> vector<128x256xf32>
    %c0_3 = arith.constant 0 : index
    %c0_4 = arith.constant 0 : index
    %45 = vector.load %arg9[%c0_3, %c0_4] : memref<128x256xf32, #tpu.memory_space<vmem>>, vector<128x256xf32>
    tpu.vector_store %arg9[%c0_3, %c0_4], %44 {strides = array<i32>} : memref<128x256xf32, #tpu.memory_space<vmem>>, vector<128x256xf32>,
    %c0_5 = arith.constant 0 : index
    %c0_6 = arith.constant 0 : index
    %46 = vector.load %arg2[%c0_5, %c0_6] : memref<64x256xf32, #tpu.memory_space<vmem>>, vector<64x256xf32>
    %cst_7 = arith.constant 0.000000e+00 : f32
    %47 = vector.broadcast %cst_7 : f32 to vector<16x64xf32>
    %cst_8 = arith.constant 0.000000e+00 : f32
    %48 = vector.broadcast %cst_8 : f32 to vector<16x64xf32>
    %c0_9 = arith.constant 0 : index
    %c0_10 = arith.constant 0 : index
    %49 = vector.load %arg9[%c0_9, %c0_10] : memref<128x256xf32, #tpu.memory_space<vmem>>, vector<16x256xf32>
    %cst_11 = arith.constant dense<0.000000e+00> : vector<16x256xf32>
    %50 = tpu.matmul %47, %46, %cst_11 {dimension_numbers = #tpu.dot_dimension_numbers<[1], [0], [0], [1], [0, 0, 1, 1], [], []>} : vector<16x64xf32>, vector<64x256xf32>, vector<16x256xf32> -> vector<16x256xf32>
    %51 = arith.addf %49, %50 : vector<16x256xf32>
    %52 = arith.negf %51 : vector<16x256xf32>
    %53 = math.exp %52 : vector<16x256xf32>
    %cst_12 = arith.constant 1.000000e+00 : f32
    %54 = vector.broadcast %cst_12 : f32 to vector<16x256xf32>
    %55 = arith.addf %54, %53 : vector<16x256xf32>
    %56 = arith.divf %54, %55 : vector<16x256xf32>
    %57 = vector.extract_strided_slice %56 {offsets = [0, 0], sizes = [16, 64], strides = [1, 1]} : vector<16x256xf32> to vector<16x64xf32>
    %58 = vector.extract_strided_slice %56 {offsets = [0, 64], sizes = [16, 64], strides = [1, 1]} : vector<16x256xf32> to vector<16x64xf32>
    %59 = vector.extract_strided_slice %56 {offsets = [0, 128], sizes = [16, 64], strides = [1, 1]} : vector<16x256xf32> to vector<16x64xf32>
    %60 = vector.extract_strided_slice %56 {offsets = [0, 192], sizes = [16, 64], strides = [1, 1]} : vector<16x256xf32> to vector<16x64xf32>
    %cst_13 = arith.constant 2.000000e+00 : f32
    %61 = vector.broadcast %cst_13 : f32 to vector<16x64xf32>
    %62 = arith.mulf %61, %60 : vector<16x64xf32>
    %cst_14 = arith.constant 1.000000e+00 : f32
    %63 = vector.broadcast %cst_14 : f32 to vector<16x64xf32>
    %64 = arith.subf %62, %63 : vector<16x64xf32>
    %65 = arith.mulf %58, %48 : vector<16x64xf32>
    %66 = arith.mulf %57, %64 : vector<16x64xf32>
    %67 = arith.addf %65, %66 : vector<16x64xf32>
    %68 = math.tanh %67 : vector<16x64xf32>
    %69 = arith.mulf %59, %68 : vector<16x64xf32>
    %c16 = arith.constant 16 : index
    %c0_15 = arith.constant 0 : index
    %70 = vector.load %arg9[%c16, %c0_15] : memref<128x256xf32, #tpu.memory_space<vmem>>, vector<16x256xf32>
    %cst_16 = arith.constant dense<0.000000e+00> : vector<16x256xf32>
    %71 = tpu.matmul %69, %46, %cst_16 {dimension_numbers = #tpu.dot_dimension_numbers<[1], [0], [0], [1], [0, 0, 1, 1], [], []>} : vector<16x64xf32>, vector<64x256xf32>, vector<16x256xf32> -> vector<16x256xf32>
    %72 = arith.addf %70, %71 : vector<16x256xf32>
    %73 = arith.negf %72 : vector<16x256xf32>
    %74 = math.exp %73 : vector<16x256xf32>
    %cst_17 = arith.constant 1.000000e+00 : f32
    %75 = vector.broadcast %cst_17 : f32 to vector<16x256xf32>
    %76 = arith.addf %75, %74 : vector<16x256xf32>
    %77 = arith.divf %75, %76 : vector<16x256xf32>
    %78 = vector.extract_strided_slice %77 {offsets = [0, 0], sizes = [16, 64], strides = [1, 1]} : vector<16x256xf32> to vector<16x64xf32>
    %79 = vector.extract_strided_slice %77 {offsets = [0, 64], sizes = [16, 64], strides = [1, 1]} : vector<16x256xf32> to vector<16x64xf32>
    %80 = vector.extract_strided_slice %77 {offsets = [0, 128], sizes = [16, 64], strides = [1, 1]} : vector<16x256xf32> to vector<16x64xf32>
    %81 = vector.extract_strided_slice %77 {offsets = [0, 192], sizes = [16, 64], strides = [1, 1]} : vector<16x256xf32> to vector<16x64xf32>
    %cst_18 = arith.constant 2.000000e+00 : f32
    %82 = vector.broadcast %cst_18 : f32 to vector<16x64xf32>
    %83 = arith.mulf %82, %81 : vector<16x64xf32>
    %cst_19 = arith.constant 1.000000e+00 : f32
    %84 = vector.broadcast %cst_19 : f32 to vector<16x64xf32>
    %85 = arith.subf %83, %84 : vector<16x64xf32>
    %86 = arith.mulf %79, %67 : vector<16x64xf32>
    %87 = arith.mulf %78, %85 : vector<16x64xf32>
    %88 = arith.addf %86, %87 : vector<16x64xf32>
    %89 = math.tanh %88 : vector<16x64xf32>
    %90 = arith.mulf %80, %89 : vector<16x64xf32>
    %c32 = arith.constant 32 : index
    %c0_20 = arith.constant 0 : index
    %91 = vector.load %arg9[%c32, %c0_20] : memref<128x256xf32, #tpu.memory_space<vmem>>, vector<16x256xf32>
    %cst_21 = arith.constant dense<0.000000e+00> : vector<16x256xf32>
    %92 = tpu.matmul %90, %46, %cst_21 {dimension_numbers = #tpu.dot_dimension_numbers<[1], [0], [0], [1], [0, 0, 1, 1], [], []>} : vector<16x64xf32>, vector<64x256xf32>, vector<16x256xf32> -> vector<16x256xf32>
    %93 = arith.addf %91, %92 : vector<16x256xf32>
    %94 = arith.negf %93 : vector<16x256xf32>
    %95 = math.exp %94 : vector<16x256xf32>
    %cst_22 = arith.constant 1.000000e+00 : f32
    %96 = vector.broadcast %cst_22 : f32 to vector<16x256xf32>
    %97 = arith.addf %96, %95 : vector<16x256xf32>
    %98 = arith.divf %96, %97 : vector<16x256xf32>
    %99 = vector.extract_strided_slice %98 {offsets = [0, 0], sizes = [16, 64], strides = [1, 1]} : vector<16x256xf32> to vector<16x64xf32>
    %100 = vector.extract_strided_slice %98 {offsets = [0, 64], sizes = [16, 64], strides = [1, 1]} : vector<16x256xf32> to vector<16x64xf32>
    %101 = vector.extract_strided_slice %98 {offsets = [0, 128], sizes = [16, 64], strides = [1, 1]} : vector<16x256xf32> to vector<16x64xf32>
    %102 = vector.extract_strided_slice %98 {offsets = [0, 192], sizes = [16, 64], strides = [1, 1]} : vector<16x256xf32> to vector<16x64xf32>
    %cst_23 = arith.constant 2.000000e+00 : f32
    %103 = vector.broadcast %cst_23 : f32 to vector<16x64xf32>
    %104 = arith.mulf %103, %102 : vector<16x64xf32>
    %cst_24 = arith.constant 1.000000e+00 : f32
    %105 = vector.broadcast %cst_24 : f32 to vector<16x64xf32>
    %106 = arith.subf %104, %105 : vector<16x64xf32>
    %107 = arith.mulf %100, %88 : vector<16x64xf32>
    %108 = arith.mulf %99, %106 : vector<16x64xf32>
    %109 = arith.addf %107, %108 : vector<16x64xf32>
    %110 = math.tanh %109 : vector<16x64xf32>
    %111 = arith.mulf %101, %110 : vector<16x64xf32>
    %c48 = arith.constant 48 : index
    %c0_25 = arith.constant 0 : index
    %112 = vector.load %arg9[%c48, %c0_25] : memref<128x256xf32, #tpu.memory_space<vmem>>, vector<16x256xf32>
    %cst_26 = arith.constant dense<0.000000e+00> : vector<16x256xf32>
    %113 = tpu.matmul %111, %46, %cst_26 {dimension_numbers = #tpu.dot_dimension_numbers<[1], [0], [0], [1], [0, 0, 1, 1], [], []>} : vector<16x64xf32>, vector<64x256xf32>, vector<16x256xf32> -> vector<16x256xf32>
    %114 = arith.addf %112, %113 : vector<16x256xf32>
    %115 = arith.negf %114 : vector<16x256xf32>
    %116 = math.exp %115 : vector<16x256xf32>
    %cst_27 = arith.constant 1.000000e+00 : f32
    %117 = vector.broadcast %cst_27 : f32 to vector<16x256xf32>
    %118 = arith.addf %117, %116 : vector<16x256xf32>
    %119 = arith.divf %117, %118 : vector<16x256xf32>
    %120 = vector.extract_strided_slice %119 {offsets = [0, 0], sizes = [16, 64], strides = [1, 1]} : vector<16x256xf32> to vector<16x64xf32>
    %121 = vector.extract_strided_slice %119 {offsets = [0, 64], sizes = [16, 64], strides = [1, 1]} : vector<16x256xf32> to vector<16x64xf32>
    %122 = vector.extract_strided_slice %119 {offsets = [0, 128], sizes = [16, 64], strides = [1, 1]} : vector<16x256xf32> to vector<16x64xf32>
    %123 = vector.extract_strided_slice %119 {offsets = [0, 192], sizes = [16, 64], strides = [1, 1]} : vector<16x256xf32> to vector<16x64xf32>
    %cst_28 = arith.constant 2.000000e+00 : f32
    %124 = vector.broadcast %cst_28 : f32 to vector<16x64xf32>
    %125 = arith.mulf %124, %123 : vector<16x64xf32>
    %cst_29 = arith.constant 1.000000e+00 : f32
    %126 = vector.broadcast %cst_29 : f32 to vector<16x64xf32>
    %127 = arith.subf %125, %126 : vector<16x64xf32>
    %128 = arith.mulf %121, %109 : vector<16x64xf32>
    %129 = arith.mulf %120, %127 : vector<16x64xf32>
    %130 = arith.addf %128, %129 : vector<16x64xf32>
    %131 = math.tanh %130 : vector<16x64xf32>
    %132 = arith.mulf %122, %131 : vector<16x64xf32>
    %c64 = arith.constant 64 : index
    %c0_30 = arith.constant 0 : index
    %133 = vector.load %arg9[%c64, %c0_30] : memref<128x256xf32, #tpu.memory_space<vmem>>, vector<16x256xf32>
    %cst_31 = arith.constant dense<0.000000e+00> : vector<16x256xf32>
    %134 = tpu.matmul %132, %46, %cst_31 {dimension_numbers = #tpu.dot_dimension_numbers<[1], [0], [0], [1], [0, 0, 1, 1], [], []>} : vector<16x64xf32>, vector<64x256xf32>, vector<16x256xf32> -> vector<16x256xf32>
    %135 = arith.addf %133, %134 : vector<16x256xf32>
    %136 = arith.negf %135 : vector<16x256xf32>
    %137 = math.exp %136 : vector<16x256xf32>
    %cst_32 = arith.constant 1.000000e+00 : f32
    %138 = vector.broadcast %cst_32 : f32 to vector<16x256xf32>
    %139 = arith.addf %138, %137 : vector<16x256xf32>
    %140 = arith.divf %138, %139 : vector<16x256xf32>
    %141 = vector.extract_strided_slice %140 {offsets = [0, 0], sizes = [16, 64], strides = [1, 1]} : vector<16x256xf32> to vector<16x64xf32>
    %142 = vector.extract_strided_slice %140 {offsets = [0, 64], sizes = [16, 64], strides = [1, 1]} : vector<16x256xf32> to vector<16x64xf32>
    %143 = vector.extract_strided_slice %140 {offsets = [0, 128], sizes = [16, 64], strides = [1, 1]} : vector<16x256xf32> to vector<16x64xf32>
    %144 = vector.extract_strided_slice %140 {offsets = [0, 192], sizes = [16, 64], strides = [1, 1]} : vector<16x256xf32> to vector<16x64xf32>
    %cst_33 = arith.constant 2.000000e+00 : f32
    %145 = vector.broadcast %cst_33 : f32 to vector<16x64xf32>
    %146 = arith.mulf %145, %144 : vector<16x64xf32>
    %cst_34 = arith.constant 1.000000e+00 : f32
    %147 = vector.broadcast %cst_34 : f32 to vector<16x64xf32>
    %148 = arith.subf %146, %147 : vector<16x64xf32>
    %149 = arith.mulf %142, %130 : vector<16x64xf32>
    %150 = arith.mulf %141, %148 : vector<16x64xf32>
    %151 = arith.addf %149, %150 : vector<16x64xf32>
    %152 = math.tanh %151 : vector<16x64xf32>
    %153 = arith.mulf %143, %152 : vector<16x64xf32>
    %c80 = arith.constant 80 : index
    %c0_35 = arith.constant 0 : index
    %154 = vector.load %arg9[%c80, %c0_35] : memref<128x256xf32, #tpu.memory_space<vmem>>, vector<16x256xf32>
    %cst_36 = arith.constant dense<0.000000e+00> : vector<16x256xf32>
    %155 = tpu.matmul %153, %46, %cst_36 {dimension_numbers = #tpu.dot_dimension_numbers<[1], [0], [0], [1], [0, 0, 1, 1], [], []>} : vector<16x64xf32>, vector<64x256xf32>, vector<16x256xf32> -> vector<16x256xf32>
    %156 = arith.addf %154, %155 : vector<16x256xf32>
    %157 = arith.negf %156 : vector<16x256xf32>
    %158 = math.exp %157 : vector<16x256xf32>
    %cst_37 = arith.constant 1.000000e+00 : f32
    %159 = vector.broadcast %cst_37 : f32 to vector<16x256xf32>
    %160 = arith.addf %159, %158 : vector<16x256xf32>
    %161 = arith.divf %159, %160 : vector<16x256xf32>
    %162 = vector.extract_strided_slice %161 {offsets = [0, 0], sizes = [16, 64], strides = [1, 1]} : vector<16x256xf32> to vector<16x64xf32>
    %163 = vector.extract_strided_slice %161 {offsets = [0, 64], sizes = [16, 64], strides = [1, 1]} : vector<16x256xf32> to vector<16x64xf32>
    %164 = vector.extract_strided_slice %161 {offsets = [0, 128], sizes = [16, 64], strides = [1, 1]} : vector<16x256xf32> to vector<16x64xf32>
    %165 = vector.extract_strided_slice %161 {offsets = [0, 192], sizes = [16, 64], strides = [1, 1]} : vector<16x256xf32> to vector<16x64xf32>
    %cst_38 = arith.constant 2.000000e+00 : f32
    %166 = vector.broadcast %cst_38 : f32 to vector<16x64xf32>
    %167 = arith.mulf %166, %165 : vector<16x64xf32>
    %cst_39 = arith.constant 1.000000e+00 : f32
    %168 = vector.broadcast %cst_39 : f32 to vector<16x64xf32>
    %169 = arith.subf %167, %168 : vector<16x64xf32>
    %170 = arith.mulf %163, %151 : vector<16x64xf32>
    %171 = arith.mulf %162, %169 : vector<16x64xf32>
    %172 = arith.addf %170, %171 : vector<16x64xf32>
    %173 = math.tanh %172 : vector<16x64xf32>
    %174 = arith.mulf %164, %173 : vector<16x64xf32>
    %c96 = arith.constant 96 : index
    %c0_40 = arith.constant 0 : index
    %175 = vector.load %arg9[%c96, %c0_40] : memref<128x256xf32, #tpu.memory_space<vmem>>, vector<16x256xf32>
    %cst_41 = arith.constant dense<0.000000e+00> : vector<16x256xf32>
    %176 = tpu.matmul %174, %46, %cst_41 {dimension_numbers = #tpu.dot_dimension_numbers<[1], [0], [0], [1], [0, 0, 1, 1], [], []>} : vector<16x64xf32>, vector<64x256xf32>, vector<16x256xf32> -> vector<16x256xf32>
    %177 = arith.addf %175, %176 : vector<16x256xf32>
    %178 = arith.negf %177 : vector<16x256xf32>
    %179 = math.exp %178 : vector<16x256xf32>
    %cst_42 = arith.constant 1.000000e+00 : f32
    %180 = vector.broadcast %cst_42 : f32 to vector<16x256xf32>
    %181 = arith.addf %180, %179 : vector<16x256xf32>
    %182 = arith.divf %180, %181 : vector<16x256xf32>
    %183 = vector.extract_strided_slice %182 {offsets = [0, 0], sizes = [16, 64], strides = [1, 1]} : vector<16x256xf32> to vector<16x64xf32>
    %184 = vector.extract_strided_slice %182 {offsets = [0, 64], sizes = [16, 64], strides = [1, 1]} : vector<16x256xf32> to vector<16x64xf32>
    %185 = vector.extract_strided_slice %182 {offsets = [0, 128], sizes = [16, 64], strides = [1, 1]} : vector<16x256xf32> to vector<16x64xf32>
    %186 = vector.extract_strided_slice %182 {offsets = [0, 192], sizes = [16, 64], strides = [1, 1]} : vector<16x256xf32> to vector<16x64xf32>
    %cst_43 = arith.constant 2.000000e+00 : f32
    %187 = vector.broadcast %cst_43 : f32 to vector<16x64xf32>
    %188 = arith.mulf %187, %186 : vector<16x64xf32>
    %cst_44 = arith.constant 1.000000e+00 : f32
    %189 = vector.broadcast %cst_44 : f32 to vector<16x64xf32>
    %190 = arith.subf %188, %189 : vector<16x64xf32>
    %191 = arith.mulf %184, %172 : vector<16x64xf32>
    %192 = arith.mulf %183, %190 : vector<16x64xf32>
    %193 = arith.addf %191, %192 : vector<16x64xf32>
    %194 = math.tanh %193 : vector<16x64xf32>
    %195 = arith.mulf %185, %194 : vector<16x64xf32>
    %c112 = arith.constant 112 : index
    %c0_45 = arith.constant 0 : index
    %196 = vector.load %arg9[%c112, %c0_45] : memref<128x256xf32, #tpu.memory_space<vmem>>, vector<16x256xf32>
    %cst_46 = arith.constant dense<0.000000e+00> : vector<16x256xf32>
    %197 = tpu.matmul %195, %46, %cst_46 {dimension_numbers = #tpu.dot_dimension_numbers<[1], [0], [0], [1], [0, 0, 1, 1], [], []>} : vector<16x64xf32>, vector<64x256xf32>, vector<16x256xf32> -> vector<16x256xf32>
    %198 = arith.addf %196, %197 : vector<16x256xf32>
    %199 = arith.negf %198 : vector<16x256xf32>
    %200 = math.exp %199 : vector<16x256xf32>
    %cst_47 = arith.constant 1.000000e+00 : f32
    %201 = vector.broadcast %cst_47 : f32 to vector<16x256xf32>
    %202 = arith.addf %201, %200 : vector<16x256xf32>
    %203 = arith.divf %201, %202 : vector<16x256xf32>
    %204 = vector.extract_strided_slice %203 {offsets = [0, 0], sizes = [16, 64], strides = [1, 1]} : vector<16x256xf32> to vector<16x64xf32>
    %205 = vector.extract_strided_slice %203 {offsets = [0, 64], sizes = [16, 64], strides = [1, 1]} : vector<16x256xf32> to vector<16x64xf32>
    %206 = vector.extract_strided_slice %203 {offsets = [0, 128], sizes = [16, 64], strides = [1, 1]} : vector<16x256xf32> to vector<16x64xf32>
    %207 = vector.extract_strided_slice %203 {offsets = [0, 192], sizes = [16, 64], strides = [1, 1]} : vector<16x256xf32> to vector<16x64xf32>
    %cst_48 = arith.constant 2.000000e+00 : f32
    %208 = vector.broadcast %cst_48 : f32 to vector<16x64xf32>
    %209 = arith.mulf %208, %207 : vector<16x64xf32>
    %cst_49 = arith.constant 1.000000e+00 : f32
    %210 = vector.broadcast %cst_49 : f32 to vector<16x64xf32>
    %211 = arith.subf %209, %210 : vector<16x64xf32>
    %212 = arith.mulf %205, %193 : vector<16x64xf32>
    %213 = arith.mulf %204, %211 : vector<16x64xf32>
    %214 = arith.addf %212, %213 : vector<16x64xf32>
    %215 = math.tanh %214 : vector<16x64xf32>
    %216 = arith.mulf %206, %215 : vector<16x64xf32>
    %c0_50 = arith.constant 0 : index
    %c0_51 = arith.constant 0 : index
    %217 = vector.load %arg3[%c0_50, %c0_51] : memref<16x16xf32, #tpu.memory_space<vmem>>, vector<16x16xf32>
    %c0_52 = arith.constant 0 : index
    %c0_53 = arith.constant 0 : index
    %218 = vector.load %arg4[%c0_52, %c0_53] : memref<64x64xf32, #tpu.memory_space<vmem>>, vector<64x64xf32>
    %cst_54 = arith.constant dense<0.000000e+00> : vector<16x64xf32>
    %219 = tpu.matmul %216, %218, %cst_54 {dimension_numbers = #tpu.dot_dimension_numbers<[1], [0], [0], [1], [0, 0, 1, 1], [], []>} : vector<16x64xf32>, vector<64x64xf32>, vector<16x64xf32> -> vector<16x64xf32>
    %cst_55 = arith.constant dense<0.000000e+00> : vector<16x64xf32>
    %220 = tpu.matmul %217, %219, %cst_55 {dimension_numbers = #tpu.dot_dimension_numbers<[1], [0], [0], [1], [0, 0, 1, 1], [], []>} : vector<16x16xf32>, vector<16x64xf32>, vector<16x64xf32> -> vector<16x64xf32>
    %c0_56 = arith.constant 0 : index
    %c0_57 = arith.constant 0 : index
    %221 = vector.load %arg5[%c0_56, %c0_57] : memref<1x64xf32, #tpu.memory_space<vmem>>, vector<1x64xf32>
    %222 = vector.broadcast %221 : vector<1x64xf32> to vector<16x64xf32>
    %223 = arith.addf %220, %222 : vector<16x64xf32>
    %cst_58 = arith.constant 0.000000e+00 : f32
    %224 = vector.broadcast %cst_58 : f32 to vector<16x64xf32>
    %225 = arith.maximumf %223, %224 : vector<16x64xf32>
    %c0_59 = arith.constant 0 : index
    %c0_60 = arith.constant 0 : index
    %226 = vector.load %arg6[%c0_59, %c0_60] : memref<64x128xf32, #tpu.memory_space<vmem>>, vector<64x128xf32>
    %cst_61 = arith.constant dense<0.000000e+00> : vector<16x128xf32>
    %227 = tpu.matmul %225, %226, %cst_61 {dimension_numbers = #tpu.dot_dimension_numbers<[1], [0], [0], [1], [0, 0, 1, 1], [], []>} : vector<16x64xf32>, vector<64x128xf32>, vector<16x128xf32> -> vector<16x128xf32>
    %cst_62 = arith.constant dense<0.000000e+00> : vector<16x128xf32>
    %228 = tpu.matmul %217, %227, %cst_62 {dimension_numbers = #tpu.dot_dimension_numbers<[1], [0], [0], [1], [0, 0, 1, 1], [], []>} : vector<16x16xf32>, vector<16x128xf32>, vector<16x128xf32> -> vector<16x128xf32>
    %c0_63 = arith.constant 0 : index
    %c0_64 = arith.constant 0 : index
    %229 = vector.load %arg7[%c0_63, %c0_64] : memref<1x128xf32, #tpu.memory_space<vmem>>, vector<1x128xf32>
    %230 = vector.broadcast %229 : vector<1x128xf32> to vector<16x128xf32>
    %231 = arith.addf %228, %230 : vector<16x128xf32>
    %c0_65 = arith.constant 0 : index
    %c0_66 = arith.constant 0 : index
    %232 = vector.load %arg8[%c0_65, %c0_66] : memref<16x128xf32, #tpu.memory_space<vmem>>, vector<16x128xf32>
    tpu.vector_store %arg8[%c0_65, %c0_66], %231 {strides = array<i32>} : memref<16x128xf32, #tpu.memory_space<vmem>>, vector<16x128xf32>,
    return
  }
}

</mosaic_0001>

<llo_original>
// kernel: gcn_lstm_forward.1
$region0: #{gcn_lstm_forward.1}
  #allocation0 [shape = 'u32[]', space=smem, size = 0x4, offset = 0x4, fixed_abs, tag = 'smem constant byte address 0x4 - core index']
  #allocation1 [shape = 'u32[144,128]{1,0:T(1,128)}', space=vmem, size = 0x12000, scoped, tag = 'internal scratch']
  #allocation2 [shape = 'f32[128,256]{1,0:T(8,128)}', space=vmem, size = 0x20000, scoped, tag = 'scratch operand']
  %s0 = inlined_call_operand.vmem [shape: s32[16,8], index: 0, kind: input, shape index: {}]
  %s1 = inlined_call_operand.hbm [shape: f32[64,256], index: 1, kind: input, shape index: {}]
  %s2 = inlined_call_operand.hbm [shape: f32[64,256], index: 2, kind: input, shape index: {}]
  %s3 = inlined_call_operand.vmem [shape: f32[16,16], index: 3, kind: input, shape index: {}]
  %s4 = inlined_call_operand.hbm [shape: f32[64,64], index: 4, kind: input, shape index: {}]
  %s5 = inlined_call_operand.vmem [shape: f32[1,64], index: 5, kind: input, shape index: {}]
  %s6 = inlined_call_operand.hbm [shape: f32[64,128], index: 6, kind: input, shape index: {}]
  %s7 = inlined_call_operand.vmem [shape: f32[1,128], index: 7, kind: input, shape index: {}]
  %s8 = inlined_call_operand.vmem [shape: f32[16,128], index: 8, kind: output, shape index: {}]
  %s9 = sld [smem:[#allocation0]]
  $region58: #{gcn_lstm_forward.1} parent=0
    _
  %s11 = ssub.s32 1, %s9
  %s12 = scalar_select 0, %s11, %s9
  $region1: #{gcn_lstm_forward.1} parent=0
    #allocation3 [shape = 'u8[65536]{0}', space=vmem, size = 0x10000, scoped, tag = 'input window, operand 1, single buffered']
    #allocation4 [shape = 's32[1]{0}', space=sflag, size = 0x4, scoped, tag = 'scoped memory for gcn_lstm_forward.1']
    #allocation5 [shape = 'u8[65536]{0}', space=vmem, size = 0x10000, scoped, tag = 'input window, operand 2, single buffered']
    #allocation6 [shape = 's32[1]{0}', space=sflag, size = 0x4, scoped, tag = 'scoped memory for gcn_lstm_forward.1']
    #allocation7 [shape = 'u8[32768]{0}', space=vmem, size = 0x8000, scoped, tag = 'input window, operand 4, single buffered']
    #allocation8 [shape = 'u8[32768]{0}', space=vmem, size = 0x8000, scoped, tag = 'input window, operand 6, single buffered']
    #allocation9 [shape = 's32[1]{0}', space=sflag, size = 0x4, scoped, tag = 'scoped memory for gcn_lstm_forward.1']
    %13 = vsyncpa [#allocation4], 0
    %14 = vsyncpa [#allocation6], 0
    %15 = vsyncpa [#allocation9], 0
    // Predicated region
    $region2: #{gcn_lstm_forward.1} parent=1 // pred_check
      _
    $region3: #{gcn_lstm_forward.1} parent=1 // pred_check_branch
      %17 = sbr.rel (0) target = $region5
    $region4: #{gcn_lstm_forward.1} parent=1 // pred_region
      _
    $region5: #{gcn_lstm_forward.1} parent=1 // pred_fallthru
      _
    // Predicated region
    $region6: #{gcn_lstm_forward.1} parent=1 // pred_check
      _
    $region7: #{gcn_lstm_forward.1} parent=1 // pred_check_branch
      %19 = sbr.rel (0) target = $region9
    $region8: #{gcn_lstm_forward.1} parent=1 // pred_region
      %s21 = ssub.s32 2048, 2048
      %22 = vsyncadd [#allocation4], %s21
      %s23 = sshll.u32 [#allocation3], 4
      %s24 = int_to_ptr.vmem [resolvable:$true] %s23
      %29 = dma.hbm_to_vmem [thread:$0]  %s1, 2048, %s24, [#allocation4], 256, 256, 16
    $region9: #{gcn_lstm_forward.1} parent=1 // pred_fallthru
      _
    // Predicated region
    $region10: #{gcn_lstm_forward.1} parent=1 // pred_check
      _
    $region11: #{gcn_lstm_forward.1} parent=1 // pred_check_branch
      %31 = sbr.rel (0) target = $region13
    $region12: #{gcn_lstm_forward.1} parent=1 // pred_region
      %s33 = ssub.s32 2048, 2048
      %34 = vsyncadd [#allocation6], %s33
      %s35 = sshll.u32 [#allocation5], 4
      %s36 = int_to_ptr.vmem [resolvable:$true] %s35
      %41 = dma.hbm_to_vmem [thread:$0]  %s2, 2048, %s36, [#allocation6], 256, 256, 16
    $region13: #{gcn_lstm_forward.1} parent=1 // pred_fallthru
      _
    // Predicated region
    $region14: #{gcn_lstm_forward.1} parent=1 // pred_check
      _
    $region15: #{gcn_lstm_forward.1} parent=1 // pred_check_branch
      %43 = sbr.rel (0) target = $region17
    $region16: #{gcn_lstm_forward.1} parent=1 // pred_region
      _
    $region17: #{gcn_lstm_forward.1} parent=1 // pred_fallthru
      _
    // Predicated region
    $region18: #{gcn_lstm_forward.1} parent=1 // pred_check
      _
    $region19: #{gcn_lstm_forward.1} parent=1 // pred_check_branch
      %45 = sbr.rel (0) target = $region21
    $region20: #{gcn_lstm_forward.1} parent=1 // pred_region
      %s47 = ssub.s32 1024, 1024
      %48 = vsyncadd [#allocation6], %s47
      %s49 = sshll.u32 [#allocation7], 4
      %s50 = int_to_ptr.vmem [resolvable:$true] %s49
      %55 = dma.hbm_to_vmem [thread:$0]  %s4, 1024, %s50, [#allocation6], 128, 128, 8
    $region21: #{gcn_lstm_forward.1} parent=1 // pred_fallthru
      _
    // Predicated region
    $region22: #{gcn_lstm_forward.1} parent=1 // pred_check
      _
    $region23: #{gcn_lstm_forward.1} parent=1 // pred_check_branch
      %57 = sbr.rel (0) target = $region25
    $region24: #{gcn_lstm_forward.1} parent=1 // pred_region
      _
    $region25: #{gcn_lstm_forward.1} parent=1 // pred_fallthru
      _
    // Predicated region
    $region26: #{gcn_lstm_forward.1} parent=1 // pred_check
      _
    $region27: #{gcn_lstm_forward.1} parent=1 // pred_check_branch
      %59 = sbr.rel (0) target = $region29
    $region28: #{gcn_lstm_forward.1} parent=1 // pred_region
      %s61 = ssub.s32 1024, 1024
      %62 = vsyncadd [#allocation9], %s61
      %s63 = sshll.u32 [#allocation8], 4
      %s64 = int_to_ptr.vmem [resolvable:$true] %s63
      %69 = dma.hbm_to_vmem [thread:$0]  %s6, 1024, %s64, [#allocation9], 128, 128, 8
    $region29: #{gcn_lstm_forward.1} parent=1 // pred_fallthru
      _
    // Predicated region
    $region30: #{gcn_lstm_forward.1} parent=1 // pred_check
      _
    $region31: #{gcn_lstm_forward.1} parent=1 // pred_check_branch
      %71 = sbr.rel (0) target = $region33
    $region32: #{gcn_lstm_forward.1} parent=1 // pred_region
      _
    $region33: #{gcn_lstm_forward.1} parent=1 // pred_fallthru
      _
    // Predicated region
    $region34: #{gcn_lstm_forward.1} parent=1 // pred_check
      _
    $region35: #{gcn_lstm_forward.1} parent=1 // pred_check_branch
      %73 = sbr.rel (0) target = $region37
    $region36: #{gcn_lstm_forward.1} parent=1 // pred_region
      %74 = dma.done [#allocation4], 2048
    $region37: #{gcn_lstm_forward.1} parent=1 // pred_fallthru
      _
    // Predicated region
    $region38: #{gcn_lstm_forward.1} parent=1 // pred_check
      _
    $region39: #{gcn_lstm_forward.1} parent=1 // pred_check_branch
      %76 = sbr.rel (0) target = $region41
    $region40: #{gcn_lstm_forward.1} parent=1 // pred_region
      %77 = dma.done [#allocation6], 2048
    $region41: #{gcn_lstm_forward.1} parent=1 // pred_fallthru
      _
    // Predicated region
    $region42: #{gcn_lstm_forward.1} parent=1 // pred_check
      _
    $region43: #{gcn_lstm_forward.1} parent=1 // pred_check_branch
      %79 = sbr.rel (0) target = $region45
    $region44: #{gcn_lstm_forward.1} parent=1 // pred_region
      %80 = dma.done [#allocation6], 1024
    $region45: #{gcn_lstm_forward.1} parent=1 // pred_fallthru
      _
    // Predicated region
    $region46: #{gcn_lstm_forward.1} parent=1 // pred_check
      _
    $region47: #{gcn_lstm_forward.1} parent=1 // pred_check_branch
      %82 = sbr.rel (0) target = $region49
    $region48: #{gcn_lstm_forward.1} parent=1 // pred_region
      %83 = dma.done [#allocation9], 1024
    $region49: #{gcn_lstm_forward.1} parent=1 // pred_fallthru
      _
    %v84 = vld [vmem:[%s0] sm:$0xff]
    %v85 = vld [vmem:[%s0 + $0x8] sm:$0xff]
    %v86 = vlaneseq
    %v87 = vand.u32 %v86, 127
    %88 = vset.pattern.permute.xlu0 0
    %89 = vperm.xlu0 %88, %v84
    %v90 = vpop.permute.xlu0 %89
    %91 = vset.pattern.permute.xlu0 0
    %92 = vperm.xlu0 %91, %v85
    %v93 = vpop.permute.xlu0 %92
    %vm94 = vcmp.eq.s32.totalorder %v90, %v87
    %vm95 = vcmp.eq.s32.totalorder %v93, %v87
    %v96 = vsel %vm94, 1, 0
    %v97 = vsel %vm95, 1, 0
    %v98 = vcvt.s32.f32 %v96
    %v99 = vcvt.s32.f32 %v97
    %100 = vset.pattern.permute.xlu0 1
    %101 = vperm.xlu0 %100, %v84
    %v102 = vpop.permute.xlu0 %101
    %103 = vset.pattern.permute.xlu0 1
    %104 = vperm.xlu0 %103, %v85
    %v105 = vpop.permute.xlu0 %104
    %vm106 = vcmp.eq.s32.totalorder %v102, %v87
    %vm107 = vcmp.eq.s32.totalorder %v105, %v87
    %v108 = vsel %vm106, 1, 0
    %v109 = vsel %vm107, 1, 0
    %v110 = vcvt.s32.f32 %v108
    %v111 = vcvt.s32.f32 %v109
    %112 = vset.pattern.permute.xlu0 2
    %113 = vperm.xlu0 %112, %v84
    %v114 = vpop.permute.xlu0 %113
    %115 = vset.pattern.permute.xlu0 2
    %116 = vperm.xlu0 %115, %v85
    %v117 = vpop.permute.xlu0 %116
    %vm118 = vcmp.eq.s32.totalorder %v114, %v87
    %vm119 = vcmp.eq.s32.totalorder %v117, %v87
    %v120 = vsel %vm118, 1, 0
    %v121 = vsel %vm119, 1, 0
    %v122 = vcvt.s32.f32 %v120
    %v123 = vcvt.s32.f32 %v121
    %124 = vset.pattern.permute.xlu0 3
    %125 = vperm.xlu0 %124, %v84
    %v126 = vpop.permute.xlu0 %125
    %127 = vset.pattern.permute.xlu0 3
    %128 = vperm.xlu0 %127, %v85
    %v129 = vpop.permute.xlu0 %128
    %vm130 = vcmp.eq.s32.totalorder %v126, %v87
    %vm131 = vcmp.eq.s32.totalorder %v129, %v87
    %v132 = vsel %vm130, 1, 0
    %v133 = vsel %vm131, 1, 0
    %v134 = vcvt.s32.f32 %v132
    %v135 = vcvt.s32.f32 %v133
    %136 = vset.pattern.permute.xlu0 4
    %137 = vperm.xlu0 %136, %v84
    %v138 = vpop.permute.xlu0 %137
    %139 = vset.pattern.permute.xlu0 4
    %140 = vperm.xlu0 %139, %v85
    %v141 = vpop.permute.xlu0 %140
    %vm142 = vcmp.eq.s32.totalorder %v138, %v87
    %vm143 = vcmp.eq.s32.totalorder %v141, %v87
    %v144 = vsel %vm142, 1, 0
    %v145 = vsel %vm143, 1, 0
    %v146 = vcvt.s32.f32 %v144
    %v147 = vcvt.s32.f32 %v145
    %148 = vset.pattern.permute.xlu0 5
    %149 = vperm.xlu0 %148, %v84
    %v150 = vpop.permute.xlu0 %149
    %151 = vset.pattern.permute.xlu0 5
    %152 = vperm.xlu0 %151, %v85
    %v153 = vpop.permute.xlu0 %152
    %vm154 = vcmp.eq.s32.totalorder %v150, %v87
    %vm155 = vcmp.eq.s32.totalorder %v153, %v87
    %v156 = vsel %vm154, 1, 0
    %v157 = vsel %vm155, 1, 0
    %v158 = vcvt.s32.f32 %v156
    %v159 = vcvt.s32.f32 %v157
    %160 = vset.pattern.permute.xlu0 6
    %161 = vperm.xlu0 %160, %v84
    %v162 = vpop.permute.xlu0 %161
    %163 = vset.pattern.permute.xlu0 6
    %164 = vperm.xlu0 %163, %v85
    %v165 = vpop.permute.xlu0 %164
    %vm166 = vcmp.eq.s32.totalorder %v162, %v87
    %vm167 = vcmp.eq.s32.totalorder %v165, %v87
    %v168 = vsel %vm166, 1, 0
    %v169 = vsel %vm167, 1, 0
    %v170 = vcvt.s32.f32 %v168
    %v171 = vcvt.s32.f32 %v169
    %172 = vset.pattern.permute.xlu0 7
    %173 = vperm.xlu0 %172, %v84
    %v174 = vpop.permute.xlu0 %173
    %175 = vset.pattern.permute.xlu0 7
    %176 = vperm.xlu0 %175, %v85
    %v177 = vpop.permute.xlu0 %176
    %vm178 = vcmp.eq.s32.totalorder %v174, %v87
    %vm179 = vcmp.eq.s32.totalorder %v177, %v87
    %v180 = vsel %vm178, 1, 0
    %v181 = vsel %vm179, 1, 0
    %v182 = vcvt.s32.f32 %v180
    %v183 = vcvt.s32.f32 %v181
    %v184 = vld [vmem:[#allocation3] sm:$0xff]
    %v185 = vld [vmem:[#allocation3 + $0x8] sm:$0xff]
    %v186 = vld [vmem:[#allocation3 + $0x10] sm:$0xff]
    %v187 = vld [vmem:[#allocation3 + $0x18] sm:$0xff]
    %v188 = vld [vmem:[#allocation3 + $0x20] sm:$0xff]
    %v189 = vld [vmem:[#allocation3 + $0x28] sm:$0xff]
    %v190 = vld [vmem:[#allocation3 + $0x30] sm:$0xff]
    %v191 = vld [vmem:[#allocation3 + $0x38] sm:$0xff]
    %v192 = vld [vmem:[#allocation3 + $0x40] sm:$0xff]
    %v193 = vld [vmem:[#allocation3 + $0x48] sm:$0xff]
    %v194 = vld [vmem:[#allocation3 + $0x50] sm:$0xff]
    %v195 = vld [vmem:[#allocation3 + $0x58] sm:$0xff]
    %v196 = vld [vmem:[#allocation3 + $0x60] sm:$0xff]
    %v197 = vld [vmem:[#allocation3 + $0x68] sm:$0xff]
    %v198 = vld [vmem:[#allocation3 + $0x70] sm:$0xff]
    %v199 = vld [vmem:[#allocation3 + $0x78] sm:$0xff]
    %vm200 = vcmask 523264
    %v202 = vsel %vm200, %v98, 0
    %v205 = vsel %vm200, %v99, 0
    %v208 = vsel %vm200, %v110, 0
    %v211 = vsel %vm200, %v111, 0
    %v214 = vsel %vm200, %v122, 0
    %v217 = vsel %vm200, %v123, 0
    %v220 = vsel %vm200, %v134, 0
    %v223 = vsel %vm200, %v135, 0
    %v226 = vsel %vm200, %v146, 0
    %v229 = vsel %vm200, %v147, 0
    %v232 = vsel %vm200, %v158, 0
    %v235 = vsel %vm200, %v159, 0
    %v238 = vsel %vm200, %v170, 0
    %v241 = vsel %vm200, %v171, 0
    %v244 = vsel %vm200, %v182, 0
    %v247 = vsel %vm200, %v183, 0
    %249 = vmatprep.subr.mxu0 %v185
    %250 = vmatpush1.msra.mxu0 %v184
    %251 = vmatprep.subr.mxu0 %v187
    %252 = vmatpush1.msra.mxu0 %v186
    %253 = vmatprep.subr.mxu0 %v189
    %254 = vmatpush1.msra.mxu0 %v188
    %255 = vmatprep.subr.mxu0 %v191
    %256 = vmatpush1.msra.mxu0 %v190
    %257 = vmatprep.subr.mxu0 %v193
    %258 = vmatpush1.msra.mxu0 %v192
    %259 = vmatprep.subr.mxu0 %v195
    %260 = vmatpush1.msra.mxu0 %v194
    %261 = vmatprep.subr.mxu0 %v197
    %262 = vmatpush1.msra.mxu0 %v196
    %263 = vmatprep.subr.mxu0 %v199
    %264 = vmatpush1.msra.mxu0 %v198
    %265 = vmatprep.subr.mxu0 0.0
    %266 = vmatpush1.msra.mxu0 0.0
    %267 = vmatprep.subr.mxu0 0.0
    %268 = vmatpush1.msra.mxu0 0.0
    %269 = vmatprep.subr.mxu0 0.0
    %270 = vmatpush1.msra.mxu0 0.0
    %271 = vmatprep.subr.mxu0 0.0
    %272 = vmatpush1.msra.mxu0 0.0
    %273 = vmatprep.subr.mxu0 0.0
    %274 = vmatpush1.msra.mxu0 0.0
    %275 = vmatprep.subr.mxu0 0.0
    %276 = vmatpush1.msra.mxu0 0.0
    %277 = vmatprep.subr.mxu0 0.0
    %278 = vmatpush1.msra.mxu0 0.0
    %279 = vmatprep.subr.mxu0 0.0
    %280 = vmatpush1.msra.mxu0 0.0
    %281 = vmatprep.subr.mxu0 0.0
    %282 = vmatpush1.msra.mxu0 0.0
    %283 = vmatprep.subr.mxu0 0.0
    %284 = vmatpush1.msra.mxu0 0.0
    %285 = vmatprep.subr.mxu0 0.0
    %286 = vmatpush1.msra.mxu0 0.0
    %287 = vmatprep.subr.mxu0 0.0
    %288 = vmatpush1.msra.mxu0 0.0
    %289 = vmatprep.subr.mxu0 0.0
    %290 = vmatpush1.msra.mxu0 0.0
    %291 = vmatprep.subr.mxu0 0.0
    %292 = vmatpush1.msra.mxu0 0.0
    %293 = vmatprep.subr.mxu0 0.0
    %294 = vmatpush1.msra.mxu0 0.0
    %295 = vmatprep.subr.mxu0 0.0
    %296 = vmatpush1.msra.mxu0 0.0
    %297 = vmatprep.subr.mxu0 0.0
    %298 = vmatpush1.msra.mxu0 0.0
    %299 = vmatprep.subr.mxu0 0.0
    %300 = vmatpush1.msra.mxu0 0.0
    %301 = vmatprep.subr.mxu0 0.0
    %302 = vmatpush1.msra.mxu0 0.0
    %303 = vmatprep.subr.mxu0 0.0
    %304 = vmatpush1.msra.mxu0 0.0
    %305 = vmatprep.subr.mxu0 0.0
    %306 = vmatpush1.msra.mxu0 0.0
    %307 = vmatprep.subr.mxu0 0.0
    %308 = vmatpush1.msra.mxu0 0.0
    %309 = vmatprep.subr.mxu0 0.0
    %310 = vmatpush1.msra.mxu0 0.0
    %311 = vmatprep.subr.mxu0 0.0
    %312 = vmatpush1.msra.mxu0 0.0
    %313 = vmatprep.mubr.f32.mxu0 0.0
    %314 = vmatmul.mubr.f32.gmra.mrb[0].mxu0 %v202
    %v315 = vpop.f32.mrb[0].mxu0
    %v316 = vadd.f32 0.0, %v315
    %v317 = vpop.f32.mrb[0].mxu0
    %v318 = vadd.f32 0.0, %v317
    %319 = vmatprep.mubr.f32.mxu0 0.0
    %320 = vmatmul.mubr.f32.gmra.mrb[0].mxu0 %v205
    %v321 = vpop.f32.mrb[0].mxu0
    %v322 = vadd.f32 0.0, %v321
    %v323 = vpop.f32.mrb[0].mxu0
    %v324 = vadd.f32 0.0, %v323
    %325 = vmatprep.mubr.f32.mxu0 0.0
    %326 = vmatmul.mubr.f32.gmra.mrb[0].mxu0 %v208
    %v327 = vpop.f32.mrb[0].mxu0
    %v328 = vadd.f32 0.0, %v327
    %v329 = vpop.f32.mrb[0].mxu0
    %v330 = vadd.f32 0.0, %v329
    %331 = vmatprep.mubr.f32.mxu0 0.0
    %332 = vmatmul.mubr.f32.gmra.mrb[0].mxu0 %v211
    %v333 = vpop.f32.mrb[0].mxu0
    %v334 = vadd.f32 0.0, %v333
    %v335 = vpop.f32.mrb[0].mxu0
    %v336 = vadd.f32 0.0, %v335
    %337 = vmatprep.mubr.f32.mxu0 0.0
    %338 = vmatmul.mubr.f32.gmra.mrb[0].mxu0 %v214
    %v339 = vpop.f32.mrb[0].mxu0
    %v340 = vadd.f32 0.0, %v339
    %v341 = vpop.f32.mrb[0].mxu0
    %v342 = vadd.f32 0.0, %v341
    %343 = vmatprep.mubr.f32.mxu0 0.0
    %344 = vmatmul.mubr.f32.gmra.mrb[0].mxu0 %v217
    %v345 = vpop.f32.mrb[0].mxu0
    %v346 = vadd.f32 0.0, %v345
    %v347 = vpop.f32.mrb[0].mxu0
    %v348 = vadd.f32 0.0, %v347
    %349 = vmatprep.mubr.f32.mxu0 0.0
    %350 = vmatmul.mubr.f32.gmra.mrb[0].mxu0 %v220
    %v351 = vpop.f32.mrb[0].mxu0
    %v352 = vadd.f32 0.0, %v351
    %v353 = vpop.f32.mrb[0].mxu0
    %v354 = vadd.f32 0.0, %v353
    %355 = vmatprep.mubr.f32.mxu0 0.0
    %356 = vmatmul.mubr.f32.gmra.mrb[0].mxu0 %v223
    %v357 = vpop.f32.mrb[0].mxu0
    %v358 = vadd.f32 0.0, %v357
    %v359 = vpop.f32.mrb[0].mxu0
    %v360 = vadd.f32 0.0, %v359
    %361 = vmatprep.mubr.f32.mxu0 0.0
    %362 = vmatmul.mubr.f32.gmra.mrb[0].mxu0 %v226
    %v363 = vpop.f32.mrb[0].mxu0
    %v364 = vadd.f32 0.0, %v363
    %v365 = vpop.f32.mrb[0].mxu0
    %v366 = vadd.f32 0.0, %v365
    %367 = vmatprep.mubr.f32.mxu0 0.0
    %368 = vmatmul.mubr.f32.gmra.mrb[0].mxu0 %v229
    %v369 = vpop.f32.mrb[0].mxu0
    %v370 = vadd.f32 0.0, %v369
    %v371 = vpop.f32.mrb[0].mxu0
    %v372 = vadd.f32 0.0, %v371
    %373 = vmatprep.mubr.f32.mxu0 0.0
    %374 = vmatmul.mubr.f32.gmra.mrb[0].mxu0 %v232
    %v375 = vpop.f32.mrb[0].mxu0
    %v376 = vadd.f32 0.0, %v375
    %v377 = vpop.f32.mrb[0].mxu0
    %v378 = vadd.f32 0.0, %v377
    %379 = vmatprep.mubr.f32.mxu0 0.0
    %380 = vmatmul.mubr.f32.gmra.mrb[0].mxu0 %v235
    %v381 = vpop.f32.mrb[0].mxu0
    %v382 = vadd.f32 0.0, %v381
    %v383 = vpop.f32.mrb[0].mxu0
    %v384 = vadd.f32 0.0, %v383
    %385 = vmatprep.mubr.f32.mxu0 0.0
    %386 = vmatmul.mubr.f32.gmra.mrb[0].mxu0 %v238
    %v387 = vpop.f32.mrb[0].mxu0
    %v388 = vadd.f32 0.0, %v387
    %v389 = vpop.f32.mrb[0].mxu0
    %v390 = vadd.f32 0.0, %v389
    %391 = vmatprep.mubr.f32.mxu0 0.0
    %392 = vmatmul.mubr.f32.gmra.mrb[0].mxu0 %v241
    %v393 = vpop.f32.mrb[0].mxu0
    %v394 = vadd.f32 0.0, %v393
    %v395 = vpop.f32.mrb[0].mxu0
    %v396 = vadd.f32 0.0, %v395
    %397 = vmatprep.mubr.f32.mxu0 0.0
    %398 = vmatmul.mubr.f32.gmra.mrb[0].mxu0 %v244
    %v399 = vpop.f32.mrb[0].mxu0
    %v400 = vadd.f32 0.0, %v399
    %v401 = vpop.f32.mrb[0].mxu0
    %v402 = vadd.f32 0.0, %v401
    %403 = vmatprep.mubr.f32.mxu0 0.0
    %404 = vmatmul.mubr.f32.gmra.mrb[0].mxu0 %v247
    %v405 = vpop.f32.mrb[0].mxu0
    %v406 = vadd.f32 0.0, %v405
    %v407 = vpop.f32.mrb[0].mxu0
    %v408 = vadd.f32 0.0, %v407
    %409 = vdwg.mxu0
    %410 = vst [vmem:[#allocation2] sm:$0xff] %v316
    %411 = vst [vmem:[#allocation2 + $0x8] sm:$0xff] %v318
    %412 = vst [vmem:[#allocation2 + $0x10] sm:$0xff] %v322
    %413 = vst [vmem:[#allocation2 + $0x18] sm:$0xff] %v324
    %414 = vst [vmem:[#allocation2 + $0x20] sm:$0xff] %v328
    %415 = vst [vmem:[#allocation2 + $0x28] sm:$0xff] %v330
    %416 = vst [vmem:[#allocation2 + $0x30] sm:$0xff] %v334
    %417 = vst [vmem:[#allocation2 + $0x38] sm:$0xff] %v336
    %418 = vst [vmem:[#allocation2 + $0x40] sm:$0xff] %v340
    %419 = vst [vmem:[#allocation2 + $0x48] sm:$0xff] %v342
    %420 = vst [vmem:[#allocation2 + $0x50] sm:$0xff] %v346
    %421 = vst [vmem:[#allocation2 + $0x58] sm:$0xff] %v348
    %422 = vst [vmem:[#allocation2 + $0x60] sm:$0xff] %v352
    %423 = vst [vmem:[#allocation2 + $0x68] sm:$0xff] %v354
    %424 = vst [vmem:[#allocation2 + $0x70] sm:$0xff] %v358
    %425 = vst [vmem:[#allocation2 + $0x78] sm:$0xff] %v360
    %426 = vst [vmem:[#allocation2 + $0x80] sm:$0xff] %v364
    %427 = vst [vmem:[#allocation2 + $0x88] sm:$0xff] %v366
    %428 = vst [vmem:[#allocation2 + $0x90] sm:$0xff] %v370
    %429 = vst [vmem:[#allocation2 + $0x98] sm:$0xff] %v372
    %430 = vst [vmem:[#allocation2 + $0xa0] sm:$0xff] %v376
    %431 = vst [vmem:[#allocation2 + $0xa8] sm:$0xff] %v378
    %432 = vst [vmem:[#allocation2 + $0xb0] sm:$0xff] %v382
    %433 = vst [vmem:[#allocation2 + $0xb8] sm:$0xff] %v384
    %434 = vst [vmem:[#allocation2 + $0xc0] sm:$0xff] %v388
    %435 = vst [vmem:[#allocation2 + $0xc8] sm:$0xff] %v390
    %436 = vst [vmem:[#allocation2 + $0xd0] sm:$0xff] %v394
    %437 = vst [vmem:[#allocation2 + $0xd8] sm:$0xff] %v396
    %438 = vst [vmem:[#allocation2 + $0xe0] sm:$0xff] %v400
    %439 = vst [vmem:[#allocation2 + $0xe8] sm:$0xff] %v402
    %440 = vst [vmem:[#allocation2 + $0xf0] sm:$0xff] %v406
    %441 = vst [vmem:[#allocation2 + $0xf8] sm:$0xff] %v408
    %v442 = vld [vmem:[#allocation5] sm:$0xff]
    %v443 = vld [vmem:[#allocation5 + $0x8] sm:$0xff]
    %v444 = vld [vmem:[#allocation5 + $0x10] sm:$0xff]
    %v445 = vld [vmem:[#allocation5 + $0x18] sm:$0xff]
    %v446 = vld [vmem:[#allocation5 + $0x20] sm:$0xff]
    %v447 = vld [vmem:[#allocation5 + $0x28] sm:$0xff]
    %v448 = vld [vmem:[#allocation5 + $0x30] sm:$0xff]
    %v449 = vld [vmem:[#allocation5 + $0x38] sm:$0xff]
    %v450 = vld [vmem:[#allocation5 + $0x40] sm:$0xff]
    %v451 = vld [vmem:[#allocation5 + $0x48] sm:$0xff]
    %v452 = vld [vmem:[#allocation5 + $0x50] sm:$0xff]
    %v453 = vld [vmem:[#allocation5 + $0x58] sm:$0xff]
    %v454 = vld [vmem:[#allocation5 + $0x60] sm:$0xff]
    %v455 = vld [vmem:[#allocation5 + $0x68] sm:$0xff]
    %v456 = vld [vmem:[#allocation5 + $0x70] sm:$0xff]
    %v457 = vld [vmem:[#allocation5 + $0x78] sm:$0xff]
    %v458 = vld [vmem:[#allocation2] sm:$0xff]
    %v459 = vld [vmem:[#allocation2 + $0x8] sm:$0xff]
    %v460 = vld [vmem:[#allocation2 + $0x10] sm:$0xff]
    %v461 = vld [vmem:[#allocation2 + $0x18] sm:$0xff]
    %v463 = vsel %vm200, 0.0, 0
    %465 = vmatprep.subr.mxu0 %v443
    %466 = vmatpush1.msra.mxu0 %v442
    %467 = vmatprep.subr.mxu0 %v445
    %468 = vmatpush1.msra.mxu0 %v444
    %469 = vmatprep.subr.mxu0 %v447
    %470 = vmatpush1.msra.mxu0 %v446
    %471 = vmatprep.subr.mxu0 %v449
    %472 = vmatpush1.msra.mxu0 %v448
    %473 = vmatprep.subr.mxu0 %v451
    %474 = vmatpush1.msra.mxu0 %v450
    %475 = vmatprep.subr.mxu0 %v453
    %476 = vmatpush1.msra.mxu0 %v452
    %477 = vmatprep.subr.mxu0 %v455
    %478 = vmatpush1.msra.mxu0 %v454
    %479 = vmatprep.subr.mxu0 %v457
    %480 = vmatpush1.msra.mxu0 %v456
    %481 = vmatprep.subr.mxu0 0.0
    %482 = vmatpush1.msra.mxu0 0.0
    %483 = vmatprep.subr.mxu0 0.0
    %484 = vmatpush1.msra.mxu0 0.0
    %485 = vmatprep.subr.mxu0 0.0
    %486 = vmatpush1.msra.mxu0 0.0
    %487 = vmatprep.subr.mxu0 0.0
    %488 = vmatpush1.msra.mxu0 0.0
    %489 = vmatprep.subr.mxu0 0.0
    %490 = vmatpush1.msra.mxu0 0.0
    %491 = vmatprep.subr.mxu0 0.0
    %492 = vmatpush1.msra.mxu0 0.0
    %493 = vmatprep.subr.mxu0 0.0
    %494 = vmatpush1.msra.mxu0 0.0
    %495 = vmatprep.subr.mxu0 0.0
    %496 = vmatpush1.msra.mxu0 0.0
    %497 = vmatprep.subr.mxu0 0.0
    %498 = vmatpush1.msra.mxu0 0.0
    %499 = vmatprep.subr.mxu0 0.0
    %500 = vmatpush1.msra.mxu0 0.0
    %501 = vmatprep.subr.mxu0 0.0
    %502 = vmatpush1.msra.mxu0 0.0
    %503 = vmatprep.subr.mxu0 0.0
    %504 = vmatpush1.msra.mxu0 0.0
    %505 = vmatprep.subr.mxu0 0.0
    %506 = vmatpush1.msra.mxu0 0.0
    %507 = vmatprep.subr.mxu0 0.0
    %508 = vmatpush1.msra.mxu0 0.0
    %509 = vmatprep.subr.mxu0 0.0
    %510 = vmatpush1.msra.mxu0 0.0
    %511 = vmatprep.subr.mxu0 0.0
    %512 = vmatpush1.msra.mxu0 0.0
    %513 = vmatprep.subr.mxu0 0.0
    %514 = vmatpush1.msra.mxu0 0.0
    %515 = vmatprep.subr.mxu0 0.0
    %516 = vmatpush1.msra.mxu0 0.0
    %517 = vmatprep.subr.mxu0 0.0
    %518 = vmatpush1.msra.mxu0 0.0
    %519 = vmatprep.subr.mxu0 0.0
    %520 = vmatpush1.msra.mxu0 0.0
    %521 = vmatprep.subr.mxu0 0.0
    %522 = vmatpush1.msra.mxu0 0.0
    %523 = vmatprep.subr.mxu0 0.0
    %524 = vmatpush1.msra.mxu0 0.0
    %525 = vmatprep.subr.mxu0 0.0
    %526 = vmatpush1.msra.mxu0 0.0
    %527 = vmatprep.subr.mxu0 0.0
    %528 = vmatpush1.msra.mxu0 0.0
    %529 = vmatprep.mubr.f32.mxu0 0.0
    %530 = vmatmul.mubr.f32.gmra.mrb[0].mxu0 %v463
    %v531 = vpop.f32.mrb[0].mxu0
    %v532 = vadd.f32 0.0, %v531
    %v533 = vpop.f32.mrb[0].mxu0
    %v534 = vadd.f32 0.0, %v533
    %535 = vmatprep.mubr.f32.mxu0 0.0
    %536 = vmatmul.mubr.f32.gmra.mrb[0].mxu0 %v463
    %v537 = vpop.f32.mrb[0].mxu0
    %v538 = vadd.f32 0.0, %v537
    %v539 = vpop.f32.mrb[0].mxu0
    %v540 = vadd.f32 0.0, %v539
    %541 = vdwg.mxu0
    %v542 = vadd.f32 %v458, %v532
    %v543 = vadd.f32 %v459, %v534
    %v544 = vadd.f32 %v460, %v538
    %v545 = vadd.f32 %v461, %v540
    %v546 = vxor.u32 %v542, 2147483648
    %v547 = vxor.u32 %v543, 2147483648
    %v548 = vxor.u32 %v544, 2147483648
    %v549 = vxor.u32 %v545, 2147483648
    %v550 = vmul.f32 %v546, 1.442695
    %v551 = vpow.pop %v550
    %v552 = vmul.f32 %v547, 1.442695
    %v553 = vpow.pop %v552
    %v554 = vmul.f32 %v548, 1.442695
    %v555 = vpow.pop %v554
    %v556 = vmul.f32 %v549, 1.442695
    %v557 = vpow.pop %v556
    %v558 = vadd.f32 %v551, 1.0
    %v559 = vadd.f32 %v553, 1.0
    %v560 = vadd.f32 %v555, 1.0
    %v561 = vadd.f32 %v557, 1.0
    %v562 = vrcp.pop %v558
    %v563 = vmul.f32 1.0, %v562
    %v564 = vrcp.pop %v559
    %v565 = vmul.f32 1.0, %v564
    %v566 = vrcp.pop %v560
    %v567 = vmul.f32 1.0, %v566
    %v568 = vrcp.pop %v561
    %v569 = vmul.f32 1.0, %v568
    %v570 = vmul.f32 %v565, 2.0
    %v571 = vmul.f32 %v569, 2.0
    %v572 = vsub.f32 %v570, 1.0
    %v573 = vsub.f32 %v571, 1.0
    %v574 = vmul.f32 %v563, 0.0
    %v575 = vmul.f32 %v567, 0.0
    %578 = vrot.lane.b32.xlu0 %v572, 64
    %v579 = vpop.permute.xlu0 %578
    %580 = vrot.lane.b32.xlu0 %v573, 64
    %v581 = vpop.permute.xlu0 %580
    %v584 = vmul.f32 %v563, %v579
    %v585 = vmul.f32 %v567, %v581
    %588 = vrot.lane.b32.xlu0 %v584, 64
    %v589 = vpop.permute.xlu0 %588
    %590 = vrot.lane.b32.xlu0 %v585, 64
    %v591 = vpop.permute.xlu0 %590
    %v594 = vadd.f32 %v574, %v589
    %v595 = vadd.f32 %v575, %v591
    %v596 = vtanh.pop %v594
    %v597 = vtanh.pop %v595
    %600 = vrot.lane.b32.xlu0 %v596, 64
    %v601 = vpop.permute.xlu0 %600
    %602 = vrot.lane.b32.xlu0 %v597, 64
    %v603 = vpop.permute.xlu0 %602
    %v606 = vmul.f32 %v565, %v601
    %v607 = vmul.f32 %v569, %v603
    %v608 = vld [vmem:[#allocation2 + $0x20] sm:$0xff]
    %v609 = vld [vmem:[#allocation2 + $0x28] sm:$0xff]
    %v610 = vld [vmem:[#allocation2 + $0x30] sm:$0xff]
    %v611 = vld [vmem:[#allocation2 + $0x38] sm:$0xff]
    %v613 = vsel %vm200, %v606, 0
    %v616 = vsel %vm200, %v607, 0
    %618 = vmatprep.subr.mxu0 %v443
    %619 = vmatpush1.msra.mxu0 %v442
    %620 = vmatprep.subr.mxu0 %v445
    %621 = vmatpush1.msra.mxu0 %v444
    %622 = vmatprep.subr.mxu0 %v447
    %623 = vmatpush1.msra.mxu0 %v446
    %624 = vmatprep.subr.mxu0 %v449
    %625 = vmatpush1.msra.mxu0 %v448
    %626 = vmatprep.subr.mxu0 %v451
    %627 = vmatpush1.msra.mxu0 %v450
    %628 = vmatprep.subr.mxu0 %v453
    %629 = vmatpush1.msra.mxu0 %v452
    %630 = vmatprep.subr.mxu0 %v455
    %631 = vmatpush1.msra.mxu0 %v454
    %632 = vmatprep.subr.mxu0 %v457
    %633 = vmatpush1.msra.mxu0 %v456
    %634 = vmatprep.subr.mxu0 0.0
    %635 = vmatpush1.msra.mxu0 0.0
    %636 = vmatprep.subr.mxu0 0.0
    %637 = vmatpush1.msra.mxu0 0.0
    %638 = vmatprep.subr.mxu0 0.0
    %639 = vmatpush1.msra.mxu0 0.0
    %640 = vmatprep.subr.mxu0 0.0
    %641 = vmatpush1.msra.mxu0 0.0
    %642 = vmatprep.subr.mxu0 0.0
    %643 = vmatpush1.msra.mxu0 0.0
    %644 = vmatprep.subr.mxu0 0.0
    %645 = vmatpush1.msra.mxu0 0.0
    %646 = vmatprep.subr.mxu0 0.0
    %647 = vmatpush1.msra.mxu0 0.0
    %648 = vmatprep.subr.mxu0 0.0
    %649 = vmatpush1.msra.mxu0 0.0
    %650 = vmatprep.subr.mxu0 0.0
    %651 = vmatpush1.msra.mxu0 0.0
    %652 = vmatprep.subr.mxu0 0.0
    %653 = vmatpush1.msra.mxu0 0.0
    %654 = vmatprep.subr.mxu0 0.0
    %655 = vmatpush1.msra.mxu0 0.0
    %656 = vmatprep.subr.mxu0 0.0
    %657 = vmatpush1.msra.mxu0 0.0
    %658 = vmatprep.subr.mxu0 0.0
    %659 = vmatpush1.msra.mxu0 0.0
    %660 = vmatprep.subr.mxu0 0.0
    %661 = vmatpush1.msra.mxu0 0.0
    %662 = vmatprep.subr.mxu0 0.0
    %663 = vmatpush1.msra.mxu0 0.0
    %664 = vmatprep.subr.mxu0 0.0
    %665 = vmatpush1.msra.mxu0 0.0
    %666 = vmatprep.subr.mxu0 0.0
    %667 = vmatpush1.msra.mxu0 0.0
    %668 = vmatprep.subr.mxu0 0.0
    %669 = vmatpush1.msra.mxu0 0.0
    %670 = vmatprep.subr.mxu0 0.0
    %671 = vmatpush1.msra.mxu0 0.0
    %672 = vmatprep.subr.mxu0 0.0
    %673 = vmatpush1.msra.mxu0 0.0
    %674 = vmatprep.subr.mxu0 0.0
    %675 = vmatpush1.msra.mxu0 0.0
    %676 = vmatprep.subr.mxu0 0.0
    %677 = vmatpush1.msra.mxu0 0.0
    %678 = vmatprep.subr.mxu0 0.0
    %679 = vmatpush1.msra.mxu0 0.0
    %680 = vmatprep.subr.mxu0 0.0
    %681 = vmatpush1.msra.mxu0 0.0
    %682 = vmatprep.mubr.f32.mxu0 0.0
    %683 = vmatmul.mubr.f32.gmra.mrb[0].mxu0 %v613
    %v684 = vpop.f32.mrb[0].mxu0
    %v685 = vadd.f32 0.0, %v684
    %v686 = vpop.f32.mrb[0].mxu0
    %v687 = vadd.f32 0.0, %v686
    %688 = vmatprep.mubr.f32.mxu0 0.0
    %689 = vmatmul.mubr.f32.gmra.mrb[0].mxu0 %v616
    %v690 = vpop.f32.mrb[0].mxu0
    %v691 = vadd.f32 0.0, %v690
    %v692 = vpop.f32.mrb[0].mxu0
    %v693 = vadd.f32 0.0, %v692
    %694 = vdwg.mxu0
    %v695 = vadd.f32 %v608, %v685
    %v696 = vadd.f32 %v609, %v687
    %v697 = vadd.f32 %v610, %v691
    %v698 = vadd.f32 %v611, %v693
    %v699 = vxor.u32 %v695, 2147483648
    %v700 = vxor.u32 %v696, 2147483648
    %v701 = vxor.u32 %v697, 2147483648
    %v702 = vxor.u32 %v698, 2147483648
    %v703 = vmul.f32 %v699, 1.442695
    %v704 = vpow.pop %v703
    %v705 = vmul.f32 %v700, 1.442695
    %v706 = vpow.pop %v705
    %v707 = vmul.f32 %v701, 1.442695
    %v708 = vpow.pop %v707
    %v709 = vmul.f32 %v702, 1.442695
    %v710 = vpow.pop %v709
    %v711 = vadd.f32 %v704, 1.0
    %v712 = vadd.f32 %v706, 1.0
    %v713 = vadd.f32 %v708, 1.0
    %v714 = vadd.f32 %v710, 1.0
    %v715 = vrcp.pop %v711
    %v716 = vmul.f32 1.0, %v715
    %v717 = vrcp.pop %v712
    %v718 = vmul.f32 1.0, %v717
    %v719 = vrcp.pop %v713
    %v720 = vmul.f32 1.0, %v719
    %v721 = vrcp.pop %v714
    %v722 = vmul.f32 1.0, %v721
    %v723 = vmul.f32 %v718, 2.0
    %v724 = vmul.f32 %v722, 2.0
    %v725 = vsub.f32 %v723, 1.0
    %v726 = vsub.f32 %v724, 1.0
    %v727 = vmul.f32 %v716, %v594
    %v728 = vmul.f32 %v720, %v595
    %731 = vrot.lane.b32.xlu0 %v725, 64
    %v732 = vpop.permute.xlu0 %731
    %733 = vrot.lane.b32.xlu0 %v726, 64
    %v734 = vpop.permute.xlu0 %733
    %v737 = vmul.f32 %v716, %v732
    %v738 = vmul.f32 %v720, %v734
    %741 = vrot.lane.b32.xlu0 %v737, 64
    %v742 = vpop.permute.xlu0 %741
    %743 = vrot.lane.b32.xlu0 %v738, 64
    %v744 = vpop.permute.xlu0 %743
    %v747 = vadd.f32 %v727, %v742
    %v748 = vadd.f32 %v728, %v744
    %v749 = vtanh.pop %v747
    %v750 = vtanh.pop %v748
    %753 = vrot.lane.b32.xlu0 %v749, 64
    %v754 = vpop.permute.xlu0 %753
    %755 = vrot.lane.b32.xlu0 %v750, 64
    %v756 = vpop.permute.xlu0 %755
    %v759 = vmul.f32 %v718, %v754
    %v760 = vmul.f32 %v722, %v756
    %v761 = vld [vmem:[#allocation2 + $0x40] sm:$0xff]
    %v762 = vld [vmem:[#allocation2 + $0x48] sm:$0xff]
    %v763 = vld [vmem:[#allocation2 + $0x50] sm:$0xff]
    %v764 = vld [vmem:[#allocation2 + $0x58] sm:$0xff]
    %v766 = vsel %vm200, %v759, 0
    %v769 = vsel %vm200, %v760, 0
    %771 = vmatprep.subr.mxu0 %v443
    %772 = vmatpush1.msra.mxu0 %v442
    %773 = vmatprep.subr.mxu0 %v445
    %774 = vmatpush1.msra.mxu0 %v444
    %775 = vmatprep.subr.mxu0 %v447
    %776 = vmatpush1.msra.mxu0 %v446
    %777 = vmatprep.subr.mxu0 %v449
    %778 = vmatpush1.msra.mxu0 %v448
    %779 = vmatprep.subr.mxu0 %v451
    %780 = vmatpush1.msra.mxu0 %v450
    %781 = vmatprep.subr.mxu0 %v453
    %782 = vmatpush1.msra.mxu0 %v452
    %783 = vmatprep.subr.mxu0 %v455
    %784 = vmatpush1.msra.mxu0 %v454
    %785 = vmatprep.subr.mxu0 %v457
    %786 = vmatpush1.msra.mxu0 %v456
    %787 = vmatprep.subr.mxu0 0.0
    %788 = vmatpush1.msra.mxu0 0.0
    %789 = vmatprep.subr.mxu0 0.0
    %790 = vmatpush1.msra.mxu0 0.0
    %791 = vmatprep.subr.mxu0 0.0
    %792 = vmatpush1.msra.mxu0 0.0
    %793 = vmatprep.subr.mxu0 0.0
    %794 = vmatpush1.msra.mxu0 0.0
    %795 = vmatprep.subr.mxu0 0.0
    %796 = vmatpush1.msra.mxu0 0.0
    %797 = vmatprep.subr.mxu0 0.0
    %798 = vmatpush1.msra.mxu0 0.0
    %799 = vmatprep.subr.mxu0 0.0
    %800 = vmatpush1.msra.mxu0 0.0
    %801 = vmatprep.subr.mxu0 0.0
    %802 = vmatpush1.msra.mxu0 0.0
    %803 = vmatprep.subr.mxu0 0.0
    %804 = vmatpush1.msra.mxu0 0.0
    %805 = vmatprep.subr.mxu0 0.0
    %806 = vmatpush1.msra.mxu0 0.0
    %807 = vmatprep.subr.mxu0 0.0
    %808 = vmatpush1.msra.mxu0 0.0
    %809 = vmatprep.subr.mxu0 0.0
    %810 = vmatpush1.msra.mxu0 0.0
    %811 = vmatprep.subr.mxu0 0.0
    %812 = vmatpush1.msra.mxu0 0.0
    %813 = vmatprep.subr.mxu0 0.0
    %814 = vmatpush1.msra.mxu0 0.0
    %815 = vmatprep.subr.mxu0 0.0
    %816 = vmatpush1.msra.mxu0 0.0
    %817 = vmatprep.subr.mxu0 0.0
    %818 = vmatpush1.msra.mxu0 0.0
    %819 = vmatprep.subr.mxu0 0.0
    %820 = vmatpush1.msra.mxu0 0.0
    %821 = vmatprep.subr.mxu0 0.0
    %822 = vmatpush1.msra.mxu0 0.0
    %823 = vmatprep.subr.mxu0 0.0
    %824 = vmatpush1.msra.mxu0 0.0
    %825 = vmatprep.subr.mxu0 0.0
    %826 = vmatpush1.msra.mxu0 0.0
    %827 = vmatprep.subr.mxu0 0.0
    %828 = vmatpush1.msra.mxu0 0.0
    %829 = vmatprep.subr.mxu0 0.0
    %830 = vmatpush1.msra.mxu0 0.0
    %831 = vmatprep.subr.mxu0 0.0
    %832 = vmatpush1.msra.mxu0 0.0
    %833 = vmatprep.subr.mxu0 0.0
    %834 = vmatpush1.msra.mxu0 0.0
    %835 = vmatprep.mubr.f32.mxu0 0.0
    %836 = vmatmul.mubr.f32.gmra.mrb[0].mxu0 %v766
    %v837 = vpop.f32.mrb[0].mxu0
    %v838 = vadd.f32 0.0, %v837
    %v839 = vpop.f32.mrb[0].mxu0
    %v840 = vadd.f32 0.0, %v839
    %841 = vmatprep.mubr.f32.mxu0 0.0
    %842 = vmatmul.mubr.f32.gmra.mrb[0].mxu0 %v769
    %v843 = vpop.f32.mrb[0].mxu0
    %v844 = vadd.f32 0.0, %v843
    %v845 = vpop.f32.mrb[0].mxu0
    %v846 = vadd.f32 0.0, %v845
    %847 = vdwg.mxu0
    %v848 = vadd.f32 %v761, %v838
    %v849 = vadd.f32 %v762, %v840
    %v850 = vadd.f32 %v763, %v844
    %v851 = vadd.f32 %v764, %v846
    %v852 = vxor.u32 %v848, 2147483648
    %v853 = vxor.u32 %v849, 2147483648
    %v854 = vxor.u32 %v850, 2147483648
    %v855 = vxor.u32 %v851, 2147483648
    %v856 = vmul.f32 %v852, 1.442695
    %v857 = vpow.pop %v856
    %v858 = vmul.f32 %v853, 1.442695
    %v859 = vpow.pop %v858
    %v860 = vmul.f32 %v854, 1.442695
    %v861 = vpow.pop %v860
    %v862 = vmul.f32 %v855, 1.442695
    %v863 = vpow.pop %v862
    %v864 = vadd.f32 %v857, 1.0
    %v865 = vadd.f32 %v859, 1.0
    %v866 = vadd.f32 %v861, 1.0
    %v867 = vadd.f32 %v863, 1.0
    %v868 = vrcp.pop %v864
    %v869 = vmul.f32 1.0, %v868
    %v870 = vrcp.pop %v865
    %v871 = vmul.f32 1.0, %v870
    %v872 = vrcp.pop %v866
    %v873 = vmul.f32 1.0, %v872
    %v874 = vrcp.pop %v867
    %v875 = vmul.f32 1.0, %v874
    %v876 = vmul.f32 %v871, 2.0
    %v877 = vmul.f32 %v875, 2.0
    %v878 = vsub.f32 %v876, 1.0
    %v879 = vsub.f32 %v877, 1.0
    %v880 = vmul.f32 %v869, %v747
    %v881 = vmul.f32 %v873, %v748
    %884 = vrot.lane.b32.xlu0 %v878, 64
    %v885 = vpop.permute.xlu0 %884
    %886 = vrot.lane.b32.xlu0 %v879, 64
    %v887 = vpop.permute.xlu0 %886
    %v890 = vmul.f32 %v869, %v885
    %v891 = vmul.f32 %v873, %v887
    %894 = vrot.lane.b32.xlu0 %v890, 64
    %v895 = vpop.permute.xlu0 %894
    %896 = vrot.lane.b32.xlu0 %v891, 64
    %v897 = vpop.permute.xlu0 %896
    %v900 = vadd.f32 %v880, %v895
    %v901 = vadd.f32 %v881, %v897
    %v902 = vtanh.pop %v900
    %v903 = vtanh.pop %v901
    %906 = vrot.lane.b32.xlu0 %v902, 64
    %v907 = vpop.permute.xlu0 %906
    %908 = vrot.lane.b32.xlu0 %v903, 64
    %v909 = vpop.permute.xlu0 %908
    %v912 = vmul.f32 %v871, %v907
    %v913 = vmul.f32 %v875, %v909
    %v914 = vld [vmem:[#allocation2 + $0x60] sm:$0xff]
    %v915 = vld [vmem:[#allocation2 + $0x68] sm:$0xff]
    %v916 = vld [vmem:[#allocation2 + $0x70] sm:$0xff]
    %v917 = vld [vmem:[#allocation2 + $0x78] sm:$0xff]
    %v919 = vsel %vm200, %v912, 0
    %v922 = vsel %vm200, %v913, 0
    %924 = vmatprep.subr.mxu0 %v443
    %925 = vmatpush1.msra.mxu0 %v442
    %926 = vmatprep.subr.mxu0 %v445
    %927 = vmatpush1.msra.mxu0 %v444
    %928 = vmatprep.subr.mxu0 %v447
    %929 = vmatpush1.msra.mxu0 %v446
    %930 = vmatprep.subr.mxu0 %v449
    %931 = vmatpush1.msra.mxu0 %v448
    %932 = vmatprep.subr.mxu0 %v451
    %933 = vmatpush1.msra.mxu0 %v450
    %934 = vmatprep.subr.mxu0 %v453
    %935 = vmatpush1.msra.mxu0 %v452
    %936 = vmatprep.subr.mxu0 %v455
    %937 = vmatpush1.msra.mxu0 %v454
    %938 = vmatprep.subr.mxu0 %v457
    %939 = vmatpush1.msra.mxu0 %v456
    %940 = vmatprep.subr.mxu0 0.0
    %941 = vmatpush1.msra.mxu0 0.0
    %942 = vmatprep.subr.mxu0 0.0
    %943 = vmatpush1.msra.mxu0 0.0
    %944 = vmatprep.subr.mxu0 0.0
    %945 = vmatpush1.msra.mxu0 0.0
    %946 = vmatprep.subr.mxu0 0.0
    %947 = vmatpush1.msra.mxu0 0.0
    %948 = vmatprep.subr.mxu0 0.0
    %949 = vmatpush1.msra.mxu0 0.0
    %950 = vmatprep.subr.mxu0 0.0
    %951 = vmatpush1.msra.mxu0 0.0
    %952 = vmatprep.subr.mxu0 0.0
    %953 = vmatpush1.msra.mxu0 0.0
    %954 = vmatprep.subr.mxu0 0.0
    %955 = vmatpush1.msra.mxu0 0.0
    %956 = vmatprep.subr.mxu0 0.0
    %957 = vmatpush1.msra.mxu0 0.0
    %958 = vmatprep.subr.mxu0 0.0
    %959 = vmatpush1.msra.mxu0 0.0
    %960 = vmatprep.subr.mxu0 0.0
    %961 = vmatpush1.msra.mxu0 0.0
    %962 = vmatprep.subr.mxu0 0.0
    %963 = vmatpush1.msra.mxu0 0.0
    %964 = vmatprep.subr.mxu0 0.0
    %965 = vmatpush1.msra.mxu0 0.0
    %966 = vmatprep.subr.mxu0 0.0
    %967 = vmatpush1.msra.mxu0 0.0
    %968 = vmatprep.subr.mxu0 0.0
    %969 = vmatpush1.msra.mxu0 0.0
    %970 = vmatprep.subr.mxu0 0.0
    %971 = vmatpush1.msra.mxu0 0.0
    %972 = vmatprep.subr.mxu0 0.0
    %973 = vmatpush1.msra.mxu0 0.0
    %974 = vmatprep.subr.mxu0 0.0
    %975 = vmatpush1.msra.mxu0 0.0
    %976 = vmatprep.subr.mxu0 0.0
    %977 = vmatpush1.msra.mxu0 0.0
    %978 = vmatprep.subr.mxu0 0.0
    %979 = vmatpush1.msra.mxu0 0.0
    %980 = vmatprep.subr.mxu0 0.0
    %981 = vmatpush1.msra.mxu0 0.0
    %982 = vmatprep.subr.mxu0 0.0
    %983 = vmatpush1.msra.mxu0 0.0
    %984 = vmatprep.subr.mxu0 0.0
    %985 = vmatpush1.msra.mxu0 0.0
    %986 = vmatprep.subr.mxu0 0.0
    %987 = vmatpush1.msra.mxu0 0.0
    %988 = vmatprep.mubr.f32.mxu0 0.0
    %989 = vmatmul.mubr.f32.gmra.mrb[0].mxu0 %v919
    %v990 = vpop.f32.mrb[0].mxu0
    %v991 = vadd.f32 0.0, %v990
    %v992 = vpop.f32.mrb[0].mxu0
    %v993 = vadd.f32 0.0, %v992
    %994 = vmatprep.mubr.f32.mxu0 0.0
    %995 = vmatmul.mubr.f32.gmra.mrb[0].mxu0 %v922
    %v996 = vpop.f32.mrb[0].mxu0
    %v997 = vadd.f32 0.0, %v996
    %v998 = vpop.f32.mrb[0].mxu0
    %v999 = vadd.f32 0.0, %v998
    %1000 = vdwg.mxu0
    %v1001 = vadd.f32 %v914, %v991
    %v1002 = vadd.f32 %v915, %v993
    %v1003 = vadd.f32 %v916, %v997
    %v1004 = vadd.f32 %v917, %v999
    %v1005 = vxor.u32 %v1001, 2147483648
    %v1006 = vxor.u32 %v1002, 2147483648
    %v1007 = vxor.u32 %v1003, 2147483648
    %v1008 = vxor.u32 %v1004, 2147483648
    %v1009 = vmul.f32 %v1005, 1.442695
    %v1010 = vpow.pop %v1009
    %v1011 = vmul.f32 %v1006, 1.442695
    %v1012 = vpow.pop %v1011
    %v1013 = vmul.f32 %v1007, 1.442695
    %v1014 = vpow.pop %v1013
    %v1015 = vmul.f32 %v1008, 1.442695
    %v1016 = vpow.pop %v1015
    %v1017 = vadd.f32 %v1010, 1.0
    %v1018 = vadd.f32 %v1012, 1.0
    %v1019 = vadd.f32 %v1014, 1.0
    %v1020 = vadd.f32 %v1016, 1.0
    %v1021 = vrcp.pop %v1017
    %v1022 = vmul.f32 1.0, %v1021
    %v1023 = vrcp.pop %v1018
    %v1024 = vmul.f32 1.0, %v1023
    %v1025 = vrcp.pop %v1019
    %v1026 = vmul.f32 1.0, %v1025
    %v1027 = vrcp.pop %v1020
    %v1028 = vmul.f32 1.0, %v1027
    %v1029 = vmul.f32 %v1024, 2.0
    %v1030 = vmul.f32 %v1028, 2.0
    %v1031 = vsub.f32 %v1029, 1.0
    %v1032 = vsub.f32 %v1030, 1.0
    %v1033 = vmul.f32 %v1022, %v900
    %v1034 = vmul.f32 %v1026, %v901
    %1037 = vrot.lane.b32.xlu0 %v1031, 64
    %v1038 = vpop.permute.xlu0 %1037
    %1039 = vrot.lane.b32.xlu0 %v1032, 64
    %v1040 = vpop.permute.xlu0 %1039
    %v1043 = vmul.f32 %v1022, %v1038
    %v1044 = vmul.f32 %v1026, %v1040
    %1047 = vrot.lane.b32.xlu0 %v1043, 64
    %v1048 = vpop.permute.xlu0 %1047
    %1049 = vrot.lane.b32.xlu0 %v1044, 64
    %v1050 = vpop.permute.xlu0 %1049
    %v1053 = vadd.f32 %v1033, %v1048
    %v1054 = vadd.f32 %v1034, %v1050
    %v1055 = vtanh.pop %v1053
    %v1056 = vtanh.pop %v1054
    %1059 = vrot.lane.b32.xlu0 %v1055, 64
    %v1060 = vpop.permute.xlu0 %1059
    %1061 = vrot.lane.b32.xlu0 %v1056, 64
    %v1062 = vpop.permute.xlu0 %1061
    %v1065 = vmul.f32 %v1024, %v1060
    %v1066 = vmul.f32 %v1028, %v1062
    %v1067 = vld [vmem:[#allocation2 + $0x80] sm:$0xff]
    %v1068 = vld [vmem:[#allocation2 + $0x88] sm:$0xff]
    %v1069 = vld [vmem:[#allocation2 + $0x90] sm:$0xff]
    %v1070 = vld [vmem:[#allocation2 + $0x98] sm:$0xff]
    %v1072 = vsel %vm200, %v1065, 0
    %v1075 = vsel %vm200, %v1066, 0
    %1077 = vmatprep.subr.mxu0 %v443
    %1078 = vmatpush1.msra.mxu0 %v442
    %1079 = vmatprep.subr.mxu0 %v445
    %1080 = vmatpush1.msra.mxu0 %v444
    %1081 = vmatprep.subr.mxu0 %v447
    %1082 = vmatpush1.msra.mxu0 %v446
    %1083 = vmatprep.subr.mxu0 %v449
    %1084 = vmatpush1.msra.mxu0 %v448
    %1085 = vmatprep.subr.mxu0 %v451
    %1086 = vmatpush1.msra.mxu0 %v450
    %1087 = vmatprep.subr.mxu0 %v453
    %1088 = vmatpush1.msra.mxu0 %v452
    %1089 = vmatprep.subr.mxu0 %v455
    %1090 = vmatpush1.msra.mxu0 %v454
    %1091 = vmatprep.subr.mxu0 %v457
    %1092 = vmatpush1.msra.mxu0 %v456
    %1093 = vmatprep.subr.mxu0 0.0
    %1094 = vmatpush1.msra.mxu0 0.0
    %1095 = vmatprep.subr.mxu0 0.0
    %1096 = vmatpush1.msra.mxu0 0.0
    %1097 = vmatprep.subr.mxu0 0.0
    %1098 = vmatpush1.msra.mxu0 0.0
    %1099 = vmatprep.subr.mxu0 0.0
    %1100 = vmatpush1.msra.mxu0 0.0
    %1101 = vmatprep.subr.mxu0 0.0
    %1102 = vmatpush1.msra.mxu0 0.0
    %1103 = vmatprep.subr.mxu0 0.0
    %1104 = vmatpush1.msra.mxu0 0.0
    %1105 = vmatprep.subr.mxu0 0.0
    %1106 = vmatpush1.msra.mxu0 0.0
    %1107 = vmatprep.subr.mxu0 0.0
    %1108 = vmatpush1.msra.mxu0 0.0
    %1109 = vmatprep.subr.mxu0 0.0
    %1110 = vmatpush1.msra.mxu0 0.0
    %1111 = vmatprep.subr.mxu0 0.0
    %1112 = vmatpush1.msra.mxu0 0.0
    %1113 = vmatprep.subr.mxu0 0.0
    %1114 = vmatpush1.msra.mxu0 0.0
    %1115 = vmatprep.subr.mxu0 0.0
    %1116 = vmatpush1.msra.mxu0 0.0
    %1117 = vmatprep.subr.mxu0 0.0
    %1118 = vmatpush1.msra.mxu0 0.0
    %1119 = vmatprep.subr.mxu0 0.0
    %1120 = vmatpush1.msra.mxu0 0.0
    %1121 = vmatprep.subr.mxu0 0.0
    %1122 = vmatpush1.msra.mxu0 0.0
    %1123 = vmatprep.subr.mxu0 0.0
    %1124 = vmatpush1.msra.mxu0 0.0
    %1125 = vmatprep.subr.mxu0 0.0
    %1126 = vmatpush1.msra.mxu0 0.0
    %1127 = vmatprep.subr.mxu0 0.0
    %1128 = vmatpush1.msra.mxu0 0.0
    %1129 = vmatprep.subr.mxu0 0.0
    %1130 = vmatpush1.msra.mxu0 0.0
    %1131 = vmatprep.subr.mxu0 0.0
    %1132 = vmatpush1.msra.mxu0 0.0
    %1133 = vmatprep.subr.mxu0 0.0
    %1134 = vmatpush1.msra.mxu0 0.0
    %1135 = vmatprep.subr.mxu0 0.0
    %1136 = vmatpush1.msra.mxu0 0.0
    %1137 = vmatprep.subr.mxu0 0.0
    %1138 = vmatpush1.msra.mxu0 0.0
    %1139 = vmatprep.subr.mxu0 0.0
    %1140 = vmatpush1.msra.mxu0 0.0
    %1141 = vmatprep.mubr.f32.mxu0 0.0
    %1142 = vmatmul.mubr.f32.gmra.mrb[0].mxu0 %v1072
    %v1143 = vpop.f32.mrb[0].mxu0
    %v1144 = vadd.f32 0.0, %v1143
    %v1145 = vpop.f32.mrb[0].mxu0
    %v1146 = vadd.f32 0.0, %v1145
    %1147 = vmatprep.mubr.f32.mxu0 0.0
    %1148 = vmatmul.mubr.f32.gmra.mrb[0].mxu0 %v1075
    %v1149 = vpop.f32.mrb[0].mxu0
    %v1150 = vadd.f32 0.0, %v1149
    %v1151 = vpop.f32.mrb[0].mxu0
    %v1152 = vadd.f32 0.0, %v1151
    %1153 = vdwg.mxu0
    %v1154 = vadd.f32 %v1067, %v1144
    %v1155 = vadd.f32 %v1068, %v1146
    %v1156 = vadd.f32 %v1069, %v1150
    %v1157 = vadd.f32 %v1070, %v1152
    %v1158 = vxor.u32 %v1154, 2147483648
    %v1159 = vxor.u32 %v1155, 2147483648
    %v1160 = vxor.u32 %v1156, 2147483648
    %v1161 = vxor.u32 %v1157, 2147483648
    %v1162 = vmul.f32 %v1158, 1.442695
    %v1163 = vpow.pop %v1162
    %v1164 = vmul.f32 %v1159, 1.442695
    %v1165 = vpow.pop %v1164
    %v1166 = vmul.f32 %v1160, 1.442695
    %v1167 = vpow.pop %v1166
    %v1168 = vmul.f32 %v1161, 1.442695
    %v1169 = vpow.pop %v1168
    %v1170 = vadd.f32 %v1163, 1.0
    %v1171 = vadd.f32 %v1165, 1.0
    %v1172 = vadd.f32 %v1167, 1.0
    %v1173 = vadd.f32 %v1169, 1.0
    %v1174 = vrcp.pop %v1170
    %v1175 = vmul.f32 1.0, %v1174
    %v1176 = vrcp.pop %v1171
    %v1177 = vmul.f32 1.0, %v1176
    %v1178 = vrcp.pop %v1172
    %v1179 = vmul.f32 1.0, %v1178
    %v1180 = vrcp.pop %v1173
    %v1181 = vmul.f32 1.0, %v1180
    %v1182 = vmul.f32 %v1177, 2.0
    %v1183 = vmul.f32 %v1181, 2.0
    %v1184 = vsub.f32 %v1182, 1.0
    %v1185 = vsub.f32 %v1183, 1.0
    %v1186 = vmul.f32 %v1175, %v1053
    %v1187 = vmul.f32 %v1179, %v1054
    %1190 = vrot.lane.b32.xlu0 %v1184, 64
    %v1191 = vpop.permute.xlu0 %1190
    %1192 = vrot.lane.b32.xlu0 %v1185, 64
    %v1193 = vpop.permute.xlu0 %1192
    %v1196 = vmul.f32 %v1175, %v1191
    %v1197 = vmul.f32 %v1179, %v1193
    %1200 = vrot.lane.b32.xlu0 %v1196, 64
    %v1201 = vpop.permute.xlu0 %1200
    %1202 = vrot.lane.b32.xlu0 %v1197, 64
    %v1203 = vpop.permute.xlu0 %1202
    %v1206 = vadd.f32 %v1186, %v1201
    %v1207 = vadd.f32 %v1187, %v1203
    %v1208 = vtanh.pop %v1206
    %v1209 = vtanh.pop %v1207
    %1212 = vrot.lane.b32.xlu0 %v1208, 64
    %v1213 = vpop.permute.xlu0 %1212
    %1214 = vrot.lane.b32.xlu0 %v1209, 64
    %v1215 = vpop.permute.xlu0 %1214
    %v1218 = vmul.f32 %v1177, %v1213
    %v1219 = vmul.f32 %v1181, %v1215
    %v1220 = vld [vmem:[#allocation2 + $0xa0] sm:$0xff]
    %v1221 = vld [vmem:[#allocation2 + $0xa8] sm:$0xff]
    %v1222 = vld [vmem:[#allocation2 + $0xb0] sm:$0xff]
    %v1223 = vld [vmem:[#allocation2 + $0xb8] sm:$0xff]
    %v1225 = vsel %vm200, %v1218, 0
    %v1228 = vsel %vm200, %v1219, 0
    %1230 = vmatprep.subr.mxu0 %v443
    %1231 = vmatpush1.msra.mxu0 %v442
    %1232 = vmatprep.subr.mxu0 %v445
    %1233 = vmatpush1.msra.mxu0 %v444
    %1234 = vmatprep.subr.mxu0 %v447
    %1235 = vmatpush1.msra.mxu0 %v446
    %1236 = vmatprep.subr.mxu0 %v449
    %1237 = vmatpush1.msra.mxu0 %v448
    %1238 = vmatprep.subr.mxu0 %v451
    %1239 = vmatpush1.msra.mxu0 %v450
    %1240 = vmatprep.subr.mxu0 %v453
    %1241 = vmatpush1.msra.mxu0 %v452
    %1242 = vmatprep.subr.mxu0 %v455
    %1243 = vmatpush1.msra.mxu0 %v454
    %1244 = vmatprep.subr.mxu0 %v457
    %1245 = vmatpush1.msra.mxu0 %v456
    %1246 = vmatprep.subr.mxu0 0.0
    %1247 = vmatpush1.msra.mxu0 0.0
    %1248 = vmatprep.subr.mxu0 0.0
    %1249 = vmatpush1.msra.mxu0 0.0
    %1250 = vmatprep.subr.mxu0 0.0
    %1251 = vmatpush1.msra.mxu0 0.0
    %1252 = vmatprep.subr.mxu0 0.0
    %1253 = vmatpush1.msra.mxu0 0.0
    %1254 = vmatprep.subr.mxu0 0.0
    %1255 = vmatpush1.msra.mxu0 0.0
    %1256 = vmatprep.subr.mxu0 0.0
    %1257 = vmatpush1.msra.mxu0 0.0
    %1258 = vmatprep.subr.mxu0 0.0
    %1259 = vmatpush1.msra.mxu0 0.0
    %1260 = vmatprep.subr.mxu0 0.0
    %1261 = vmatpush1.msra.mxu0 0.0
    %1262 = vmatprep.subr.mxu0 0.0
    %1263 = vmatpush1.msra.mxu0 0.0
    %1264 = vmatprep.subr.mxu0 0.0
    %1265 = vmatpush1.msra.mxu0 0.0
    %1266 = vmatprep.subr.mxu0 0.0
    %1267 = vmatpush1.msra.mxu0 0.0
    %1268 = vmatprep.subr.mxu0 0.0
    %1269 = vmatpush1.msra.mxu0 0.0
    %1270 = vmatprep.subr.mxu0 0.0
    %1271 = vmatpush1.msra.mxu0 0.0
    %1272 = vmatprep.subr.mxu0 0.0
    %1273 = vmatpush1.msra.mxu0 0.0
    %1274 = vmatprep.subr.mxu0 0.0
    %1275 = vmatpush1.msra.mxu0 0.0
    %1276 = vmatprep.subr.mxu0 0.0
    %1277 = vmatpush1.msra.mxu0 0.0
    %1278 = vmatprep.subr.mxu0 0.0
    %1279 = vmatpush1.msra.mxu0 0.0
    %1280 = vmatprep.subr.mxu0 0.0
    %1281 = vmatpush1.msra.mxu0 0.0
    %1282 = vmatprep.subr.mxu0 0.0
    %1283 = vmatpush1.msra.mxu0 0.0
    %1284 = vmatprep.subr.mxu0 0.0
    %1285 = vmatpush1.msra.mxu0 0.0
    %1286 = vmatprep.subr.mxu0 0.0
    %1287 = vmatpush1.msra.mxu0 0.0
    %1288 = vmatprep.subr.mxu0 0.0
    %1289 = vmatpush1.msra.mxu0 0.0
    %1290 = vmatprep.subr.mxu0 0.0
    %1291 = vmatpush1.msra.mxu0 0.0
    %1292 = vmatprep.subr.mxu0 0.0
    %1293 = vmatpush1.msra.mxu0 0.0
    %1294 = vmatprep.mubr.f32.mxu0 0.0
    %1295 = vmatmul.mubr.f32.gmra.mrb[0].mxu0 %v1225
    %v1296 = vpop.f32.mrb[0].mxu0
    %v1297 = vadd.f32 0.0, %v1296
    %v1298 = vpop.f32.mrb[0].mxu0
    %v1299 = vadd.f32 0.0, %v1298
    %1300 = vmatprep.mubr.f32.mxu0 0.0
    %1301 = vmatmul.mubr.f32.gmra.mrb[0].mxu0 %v1228
    %v1302 = vpop.f32.mrb[0].mxu0
    %v1303 = vadd.f32 0.0, %v1302
    %v1304 = vpop.f32.mrb[0].mxu0
    %v1305 = vadd.f32 0.0, %v1304
    %1306 = vdwg.mxu0
    %v1307 = vadd.f32 %v1220, %v1297
    %v1308 = vadd.f32 %v1221, %v1299
    %v1309 = vadd.f32 %v1222, %v1303
    %v1310 = vadd.f32 %v1223, %v1305
    %v1311 = vxor.u32 %v1307, 2147483648
    %v1312 = vxor.u32 %v1308, 2147483648
    %v1313 = vxor.u32 %v1309, 2147483648
    %v1314 = vxor.u32 %v1310, 2147483648
    %v1315 = vmul.f32 %v1311, 1.442695
    %v1316 = vpow.pop %v1315
    %v1317 = vmul.f32 %v1312, 1.442695
    %v1318 = vpow.pop %v1317
    %v1319 = vmul.f32 %v1313, 1.442695
    %v1320 = vpow.pop %v1319
    %v1321 = vmul.f32 %v1314, 1.442695
    %v1322 = vpow.pop %v1321
    %v1323 = vadd.f32 %v1316, 1.0
    %v1324 = vadd.f32 %v1318, 1.0
    %v1325 = vadd.f32 %v1320, 1.0
    %v1326 = vadd.f32 %v1322, 1.0
    %v1327 = vrcp.pop %v1323
    %v1328 = vmul.f32 1.0, %v1327
    %v1329 = vrcp.pop %v1324
    %v1330 = vmul.f32 1.0, %v1329
    %v1331 = vrcp.pop %v1325
    %v1332 = vmul.f32 1.0, %v1331
    %v1333 = vrcp.pop %v1326
    %v1334 = vmul.f32 1.0, %v1333
    %v1335 = vmul.f32 %v1330, 2.0
    %v1336 = vmul.f32 %v1334, 2.0
    %v1337 = vsub.f32 %v1335, 1.0
    %v1338 = vsub.f32 %v1336, 1.0
    %v1339 = vmul.f32 %v1328, %v1206
    %v1340 = vmul.f32 %v1332, %v1207
    %1343 = vrot.lane.b32.xlu0 %v1337, 64
    %v1344 = vpop.permute.xlu0 %1343
    %1345 = vrot.lane.b32.xlu0 %v1338, 64
    %v1346 = vpop.permute.xlu0 %1345
    %v1349 = vmul.f32 %v1328, %v1344
    %v1350 = vmul.f32 %v1332, %v1346
    %1353 = vrot.lane.b32.xlu0 %v1349, 64
    %v1354 = vpop.permute.xlu0 %1353
    %1355 = vrot.lane.b32.xlu0 %v1350, 64
    %v1356 = vpop.permute.xlu0 %1355
    %v1359 = vadd.f32 %v1339, %v1354
    %v1360 = vadd.f32 %v1340, %v1356
    %v1361 = vtanh.pop %v1359
    %v1362 = vtanh.pop %v1360
    %1365 = vrot.lane.b32.xlu0 %v1361, 64
    %v1366 = vpop.permute.xlu0 %1365
    %1367 = vrot.lane.b32.xlu0 %v1362, 64
    %v1368 = vpop.permute.xlu0 %1367
    %v1371 = vmul.f32 %v1330, %v1366
    %v1372 = vmul.f32 %v1334, %v1368
    %v1373 = vld [vmem:[#allocation2 + $0xc0] sm:$0xff]
    %v1374 = vld [vmem:[#allocation2 + $0xc8] sm:$0xff]
    %v1375 = vld [vmem:[#allocation2 + $0xd0] sm:$0xff]
    %v1376 = vld [vmem:[#allocation2 + $0xd8] sm:$0xff]
    %v1378 = vsel %vm200, %v1371, 0
    %v1381 = vsel %vm200, %v1372, 0
    %1383 = vmatprep.subr.mxu0 %v443
    %1384 = vmatpush1.msra.mxu0 %v442
    %1385 = vmatprep.subr.mxu0 %v445
    %1386 = vmatpush1.msra.mxu0 %v444
    %1387 = vmatprep.subr.mxu0 %v447
    %1388 = vmatpush1.msra.mxu0 %v446
    %1389 = vmatprep.subr.mxu0 %v449
    %1390 = vmatpush1.msra.mxu0 %v448
    %1391 = vmatprep.subr.mxu0 %v451
    %1392 = vmatpush1.msra.mxu0 %v450
    %1393 = vmatprep.subr.mxu0 %v453
    %1394 = vmatpush1.msra.mxu0 %v452
    %1395 = vmatprep.subr.mxu0 %v455
    %1396 = vmatpush1.msra.mxu0 %v454
    %1397 = vmatprep.subr.mxu0 %v457
    %1398 = vmatpush1.msra.mxu0 %v456
    %1399 = vmatprep.subr.mxu0 0.0
    %1400 = vmatpush1.msra.mxu0 0.0
    %1401 = vmatprep.subr.mxu0 0.0
    %1402 = vmatpush1.msra.mxu0 0.0
    %1403 = vmatprep.subr.mxu0 0.0
    %1404 = vmatpush1.msra.mxu0 0.0
    %1405 = vmatprep.subr.mxu0 0.0
    %1406 = vmatpush1.msra.mxu0 0.0
    %1407 = vmatprep.subr.mxu0 0.0
    %1408 = vmatpush1.msra.mxu0 0.0
    %1409 = vmatprep.subr.mxu0 0.0
    %1410 = vmatpush1.msra.mxu0 0.0
    %1411 = vmatprep.subr.mxu0 0.0
    %1412 = vmatpush1.msra.mxu0 0.0
    %1413 = vmatprep.subr.mxu0 0.0
    %1414 = vmatpush1.msra.mxu0 0.0
    %1415 = vmatprep.subr.mxu0 0.0
    %1416 = vmatpush1.msra.mxu0 0.0
    %1417 = vmatprep.subr.mxu0 0.0
    %1418 = vmatpush1.msra.mxu0 0.0
    %1419 = vmatprep.subr.mxu0 0.0
    %1420 = vmatpush1.msra.mxu0 0.0
    %1421 = vmatprep.subr.mxu0 0.0
    %1422 = vmatpush1.msra.mxu0 0.0
    %1423 = vmatprep.subr.mxu0 0.0
    %1424 = vmatpush1.msra.mxu0 0.0
    %1425 = vmatprep.subr.mxu0 0.0
    %1426 = vmatpush1.msra.mxu0 0.0
    %1427 = vmatprep.subr.mxu0 0.0
    %1428 = vmatpush1.msra.mxu0 0.0
    %1429 = vmatprep.subr.mxu0 0.0
    %1430 = vmatpush1.msra.mxu0 0.0
    %1431 = vmatprep.subr.mxu0 0.0
    %1432 = vmatpush1.msra.mxu0 0.0
    %1433 = vmatprep.subr.mxu0 0.0
    %1434 = vmatpush1.msra.mxu0 0.0
    %1435 = vmatprep.subr.mxu0 0.0
    %1436 = vmatpush1.msra.mxu0 0.0
    %1437 = vmatprep.subr.mxu0 0.0
    %1438 = vmatpush1.msra.mxu0 0.0
    %1439 = vmatprep.subr.mxu0 0.0
    %1440 = vmatpush1.msra.mxu0 0.0
    %1441 = vmatprep.subr.mxu0 0.0
    %1442 = vmatpush1.msra.mxu0 0.0
    %1443 = vmatprep.subr.mxu0 0.0
    %1444 = vmatpush1.msra.mxu0 0.0
    %1445 = vmatprep.subr.mxu0 0.0
    %1446 = vmatpush1.msra.mxu0 0.0
    %1447 = vmatprep.mubr.f32.mxu0 0.0
    %1448 = vmatmul.mubr.f32.gmra.mrb[0].mxu0 %v1378
    %v1449 = vpop.f32.mrb[0].mxu0
    %v1450 = vadd.f32 0.0, %v1449
    %v1451 = vpop.f32.mrb[0].mxu0
    %v1452 = vadd.f32 0.0, %v1451
    %1453 = vmatprep.mubr.f32.mxu0 0.0
    %1454 = vmatmul.mubr.f32.gmra.mrb[0].mxu0 %v1381
    %v1455 = vpop.f32.mrb[0].mxu0
    %v1456 = vadd.f32 0.0, %v1455
    %v1457 = vpop.f32.mrb[0].mxu0
    %v1458 = vadd.f32 0.0, %v1457
    %1459 = vdwg.mxu0
    %v1460 = vadd.f32 %v1373, %v1450
    %v1461 = vadd.f32 %v1374, %v1452
    %v1462 = vadd.f32 %v1375, %v1456
    %v1463 = vadd.f32 %v1376, %v1458
    %v1464 = vxor.u32 %v1460, 2147483648
    %v1465 = vxor.u32 %v1461, 2147483648
    %v1466 = vxor.u32 %v1462, 2147483648
    %v1467 = vxor.u32 %v1463, 2147483648
    %v1468 = vmul.f32 %v1464, 1.442695
    %v1469 = vpow.pop %v1468
    %v1470 = vmul.f32 %v1465, 1.442695
    %v1471 = vpow.pop %v1470
    %v1472 = vmul.f32 %v1466, 1.442695
    %v1473 = vpow.pop %v1472
    %v1474 = vmul.f32 %v1467, 1.442695
    %v1475 = vpow.pop %v1474
    %v1476 = vadd.f32 %v1469, 1.0
    %v1477 = vadd.f32 %v1471, 1.0
    %v1478 = vadd.f32 %v1473, 1.0
    %v1479 = vadd.f32 %v1475, 1.0
    %v1480 = vrcp.pop %v1476
    %v1481 = vmul.f32 1.0, %v1480
    %v1482 = vrcp.pop %v1477
    %v1483 = vmul.f32 1.0, %v1482
    %v1484 = vrcp.pop %v1478
    %v1485 = vmul.f32 1.0, %v1484
    %v1486 = vrcp.pop %v1479
    %v1487 = vmul.f32 1.0, %v1486
    %v1488 = vmul.f32 %v1483, 2.0
    %v1489 = vmul.f32 %v1487, 2.0
    %v1490 = vsub.f32 %v1488, 1.0
    %v1491 = vsub.f32 %v1489, 1.0
    %v1492 = vmul.f32 %v1481, %v1359
    %v1493 = vmul.f32 %v1485, %v1360
    %1496 = vrot.lane.b32.xlu0 %v1490, 64
    %v1497 = vpop.permute.xlu0 %1496
    %1498 = vrot.lane.b32.xlu0 %v1491, 64
    %v1499 = vpop.permute.xlu0 %1498
    %v1502 = vmul.f32 %v1481, %v1497
    %v1503 = vmul.f32 %v1485, %v1499
    %1506 = vrot.lane.b32.xlu0 %v1502, 64
    %v1507 = vpop.permute.xlu0 %1506
    %1508 = vrot.lane.b32.xlu0 %v1503, 64
    %v1509 = vpop.permute.xlu0 %1508
    %v1512 = vadd.f32 %v1492, %v1507
    %v1513 = vadd.f32 %v1493, %v1509
    %v1514 = vtanh.pop %v1512
    %v1515 = vtanh.pop %v1513
    %1518 = vrot.lane.b32.xlu0 %v1514, 64
    %v1519 = vpop.permute.xlu0 %1518
    %1520 = vrot.lane.b32.xlu0 %v1515, 64
    %v1521 = vpop.permute.xlu0 %1520
    %v1524 = vmul.f32 %v1483, %v1519
    %v1525 = vmul.f32 %v1487, %v1521
    %v1526 = vld [vmem:[#allocation2 + $0xe0] sm:$0xff]
    %v1527 = vld [vmem:[#allocation2 + $0xe8] sm:$0xff]
    %v1528 = vld [vmem:[#allocation2 + $0xf0] sm:$0xff]
    %v1529 = vld [vmem:[#allocation2 + $0xf8] sm:$0xff]
    %v1531 = vsel %vm200, %v1524, 0
    %v1534 = vsel %vm200, %v1525, 0
    %1536 = vmatprep.subr.mxu0 %v443
    %1537 = vmatpush1.msra.mxu0 %v442
    %1538 = vmatprep.subr.mxu0 %v445
    %1539 = vmatpush1.msra.mxu0 %v444
    %1540 = vmatprep.subr.mxu0 %v447
    %1541 = vmatpush1.msra.mxu0 %v446
    %1542 = vmatprep.subr.mxu0 %v449
    %1543 = vmatpush1.msra.mxu0 %v448
    %1544 = vmatprep.subr.mxu0 %v451
    %1545 = vmatpush1.msra.mxu0 %v450
    %1546 = vmatprep.subr.mxu0 %v453
    %1547 = vmatpush1.msra.mxu0 %v452
    %1548 = vmatprep.subr.mxu0 %v455
    %1549 = vmatpush1.msra.mxu0 %v454
    %1550 = vmatprep.subr.mxu0 %v457
    %1551 = vmatpush1.msra.mxu0 %v456
    %1552 = vmatprep.subr.mxu0 0.0
    %1553 = vmatpush1.msra.mxu0 0.0
    %1554 = vmatprep.subr.mxu0 0.0
    %1555 = vmatpush1.msra.mxu0 0.0
    %1556 = vmatprep.subr.mxu0 0.0
    %1557 = vmatpush1.msra.mxu0 0.0
    %1558 = vmatprep.subr.mxu0 0.0
    %1559 = vmatpush1.msra.mxu0 0.0
    %1560 = vmatprep.subr.mxu0 0.0
    %1561 = vmatpush1.msra.mxu0 0.0
    %1562 = vmatprep.subr.mxu0 0.0
    %1563 = vmatpush1.msra.mxu0 0.0
    %1564 = vmatprep.subr.mxu0 0.0
    %1565 = vmatpush1.msra.mxu0 0.0
    %1566 = vmatprep.subr.mxu0 0.0
    %1567 = vmatpush1.msra.mxu0 0.0
    %1568 = vmatprep.subr.mxu0 0.0
    %1569 = vmatpush1.msra.mxu0 0.0
    %1570 = vmatprep.subr.mxu0 0.0
    %1571 = vmatpush1.msra.mxu0 0.0
    %1572 = vmatprep.subr.mxu0 0.0
    %1573 = vmatpush1.msra.mxu0 0.0
    %1574 = vmatprep.subr.mxu0 0.0
    %1575 = vmatpush1.msra.mxu0 0.0
    %1576 = vmatprep.subr.mxu0 0.0
    %1577 = vmatpush1.msra.mxu0 0.0
    %1578 = vmatprep.subr.mxu0 0.0
    %1579 = vmatpush1.msra.mxu0 0.0
    %1580 = vmatprep.subr.mxu0 0.0
    %1581 = vmatpush1.msra.mxu0 0.0
    %1582 = vmatprep.subr.mxu0 0.0
    %1583 = vmatpush1.msra.mxu0 0.0
    %1584 = vmatprep.subr.mxu0 0.0
    %1585 = vmatpush1.msra.mxu0 0.0
    %1586 = vmatprep.subr.mxu0 0.0
    %1587 = vmatpush1.msra.mxu0 0.0
    %1588 = vmatprep.subr.mxu0 0.0
    %1589 = vmatpush1.msra.mxu0 0.0
    %1590 = vmatprep.subr.mxu0 0.0
    %1591 = vmatpush1.msra.mxu0 0.0
    %1592 = vmatprep.subr.mxu0 0.0
    %1593 = vmatpush1.msra.mxu0 0.0
    %1594 = vmatprep.subr.mxu0 0.0
    %1595 = vmatpush1.msra.mxu0 0.0
    %1596 = vmatprep.subr.mxu0 0.0
    %1597 = vmatpush1.msra.mxu0 0.0
    %1598 = vmatprep.subr.mxu0 0.0
    %1599 = vmatpush1.msra.mxu0 0.0
    %1600 = vmatprep.mubr.f32.mxu0 0.0
    %1601 = vmatmul.mubr.f32.gmra.mrb[0].mxu0 %v1531
    %v1602 = vpop.f32.mrb[0].mxu0
    %v1603 = vadd.f32 0.0, %v1602
    %v1604 = vpop.f32.mrb[0].mxu0
    %v1605 = vadd.f32 0.0, %v1604
    %1606 = vmatprep.mubr.f32.mxu0 0.0
    %1607 = vmatmul.mubr.f32.gmra.mrb[0].mxu0 %v1534
    %v1608 = vpop.f32.mrb[0].mxu0
    %v1609 = vadd.f32 0.0, %v1608
    %v1610 = vpop.f32.mrb[0].mxu0
    %v1611 = vadd.f32 0.0, %v1610
    %1612 = vdwg.mxu0
    %v1613 = vadd.f32 %v1526, %v1603
    %v1614 = vadd.f32 %v1527, %v1605
    %v1615 = vadd.f32 %v1528, %v1609
    %v1616 = vadd.f32 %v1529, %v1611
    %v1617 = vxor.u32 %v1613, 2147483648
    %v1618 = vxor.u32 %v1614, 2147483648
    %v1619 = vxor.u32 %v1615, 2147483648
    %v1620 = vxor.u32 %v1616, 2147483648
    %v1621 = vmul.f32 %v1617, 1.442695
    %v1622 = vpow.pop %v1621
    %v1623 = vmul.f32 %v1618, 1.442695
    %v1624 = vpow.pop %v1623
    %v1625 = vmul.f32 %v1619, 1.442695
    %v1626 = vpow.pop %v1625
    %v1627 = vmul.f32 %v1620, 1.442695
    %v1628 = vpow.pop %v1627
    %v1629 = vadd.f32 %v1622, 1.0
    %v1630 = vadd.f32 %v1624, 1.0
    %v1631 = vadd.f32 %v1626, 1.0
    %v1632 = vadd.f32 %v1628, 1.0
    %v1633 = vrcp.pop %v1629
    %v1634 = vmul.f32 1.0, %v1633
    %v1635 = vrcp.pop %v1630
    %v1636 = vmul.f32 1.0, %v1635
    %v1637 = vrcp.pop %v1631
    %v1638 = vmul.f32 1.0, %v1637
    %v1639 = vrcp.pop %v1632
    %v1640 = vmul.f32 1.0, %v1639
    %v1641 = vmul.f32 %v1636, 2.0
    %v1642 = vmul.f32 %v1640, 2.0
    %v1643 = vsub.f32 %v1641, 1.0
    %v1644 = vsub.f32 %v1642, 1.0
    %v1645 = vmul.f32 %v1634, %v1512
    %v1646 = vmul.f32 %v1638, %v1513
    %1649 = vrot.lane.b32.xlu0 %v1643, 64
    %v1650 = vpop.permute.xlu0 %1649
    %1651 = vrot.lane.b32.xlu0 %v1644, 64
    %v1652 = vpop.permute.xlu0 %1651
    %v1655 = vmul.f32 %v1634, %v1650
    %v1656 = vmul.f32 %v1638, %v1652
    %1659 = vrot.lane.b32.xlu0 %v1655, 64
    %v1660 = vpop.permute.xlu0 %1659
    %1661 = vrot.lane.b32.xlu0 %v1656, 64
    %v1662 = vpop.permute.xlu0 %1661
    %v1665 = vadd.f32 %v1645, %v1660
    %v1666 = vadd.f32 %v1646, %v1662
    %v1667 = vtanh.pop %v1665
    %v1668 = vtanh.pop %v1666
    %1671 = vrot.lane.b32.xlu0 %v1667, 64
    %v1672 = vpop.permute.xlu0 %1671
    %1673 = vrot.lane.b32.xlu0 %v1668, 64
    %v1674 = vpop.permute.xlu0 %1673
    %v1677 = vmul.f32 %v1636, %v1672
    %v1678 = vmul.f32 %v1640, %v1674
    %v1679 = vld [vmem:[%s3] sm:$0xff]
    %v1680 = vld [vmem:[%s3 + $0x8] sm:$0xff]
    %v1681 = vld [vmem:[#allocation7] sm:$0xff]
    %v1682 = vld [vmem:[#allocation7 + $0x8] sm:$0xff]
    %v1683 = vld [vmem:[#allocation7 + $0x10] sm:$0xff]
    %v1684 = vld [vmem:[#allocation7 + $0x18] sm:$0xff]
    %v1685 = vld [vmem:[#allocation7 + $0x20] sm:$0xff]
    %v1686 = vld [vmem:[#allocation7 + $0x28] sm:$0xff]
    %v1687 = vld [vmem:[#allocation7 + $0x30] sm:$0xff]
    %v1688 = vld [vmem:[#allocation7 + $0x38] sm:$0xff]
    %v1690 = vsel %vm200, %v1677, 0
    %v1693 = vsel %vm200, %v1678, 0
    %1695 = vmatprep.subr.mxu0 0.0
    %1696 = vmatpush1.msra.mxu0 %v1681
    %1697 = vmatprep.subr.mxu0 0.0
    %1698 = vmatpush1.msra.mxu0 %v1682
    %1699 = vmatprep.subr.mxu0 0.0
    %1700 = vmatpush1.msra.mxu0 %v1683
    %1701 = vmatprep.subr.mxu0 0.0
    %1702 = vmatpush1.msra.mxu0 %v1684
    %1703 = vmatprep.subr.mxu0 0.0
    %1704 = vmatpush1.msra.mxu0 %v1685
    %1705 = vmatprep.subr.mxu0 0.0
    %1706 = vmatpush1.msra.mxu0 %v1686
    %1707 = vmatprep.subr.mxu0 0.0
    %1708 = vmatpush1.msra.mxu0 %v1687
    %1709 = vmatprep.subr.mxu0 0.0
    %1710 = vmatpush1.msra.mxu0 %v1688
    %1711 = vmatprep.subr.mxu0 0.0
    %1712 = vmatpush1.msra.mxu0 0.0
    %1713 = vmatprep.subr.mxu0 0.0
    %1714 = vmatpush1.msra.mxu0 0.0
    %1715 = vmatprep.subr.mxu0 0.0
    %1716 = vmatpush1.msra.mxu0 0.0
    %1717 = vmatprep.subr.mxu0 0.0
    %1718 = vmatpush1.msra.mxu0 0.0
    %1719 = vmatprep.subr.mxu0 0.0
    %1720 = vmatpush1.msra.mxu0 0.0
    %1721 = vmatprep.subr.mxu0 0.0
    %1722 = vmatpush1.msra.mxu0 0.0
    %1723 = vmatprep.subr.mxu0 0.0
    %1724 = vmatpush1.msra.mxu0 0.0
    %1725 = vmatprep.subr.mxu0 0.0
    %1726 = vmatpush1.msra.mxu0 0.0
    %1727 = vmatprep.subr.mxu0 0.0
    %1728 = vmatpush1.msra.mxu0 0.0
    %1729 = vmatprep.subr.mxu0 0.0
    %1730 = vmatpush1.msra.mxu0 0.0
    %1731 = vmatprep.subr.mxu0 0.0
    %1732 = vmatpush1.msra.mxu0 0.0
    %1733 = vmatprep.subr.mxu0 0.0
    %1734 = vmatpush1.msra.mxu0 0.0
    %1735 = vmatprep.subr.mxu0 0.0
    %1736 = vmatpush1.msra.mxu0 0.0
    %1737 = vmatprep.subr.mxu0 0.0
    %1738 = vmatpush1.msra.mxu0 0.0
    %1739 = vmatprep.subr.mxu0 0.0
    %1740 = vmatpush1.msra.mxu0 0.0
    %1741 = vmatprep.subr.mxu0 0.0
    %1742 = vmatpush1.msra.mxu0 0.0
    %1743 = vmatprep.subr.mxu0 0.0
    %1744 = vmatpush1.msra.mxu0 0.0
    %1745 = vmatprep.subr.mxu0 0.0
    %1746 = vmatpush1.msra.mxu0 0.0
    %1747 = vmatprep.subr.mxu0 0.0
    %1748 = vmatpush1.msra.mxu0 0.0
    %1749 = vmatprep.subr.mxu0 0.0
    %1750 = vmatpush1.msra.mxu0 0.0
    %1751 = vmatprep.subr.mxu0 0.0
    %1752 = vmatpush1.msra.mxu0 0.0
    %1753 = vmatprep.subr.mxu0 0.0
    %1754 = vmatpush1.msra.mxu0 0.0
    %1755 = vmatprep.subr.mxu0 0.0
    %1756 = vmatpush1.msra.mxu0 0.0
    %1757 = vmatprep.subr.mxu0 0.0
    %1758 = vmatpush1.msra.mxu0 0.0
    %1759 = vmatprep.mubr.f32.mxu0 0.0
    %1760 = vmatmul.mubr.f32.gmra.mrb[0].mxu0 %v1690
    %v1761 = vpop.f32.mrb[0].mxu0
    %v1762 = vadd.f32 0.0, %v1761
    %v1763 = vpop.f32.mrb[0].mxu0
    %1764 = vmatprep.mubr.f32.mxu0 0.0
    %1765 = vmatmul.mubr.f32.gmra.mrb[0].mxu0 %v1693
    %v1766 = vpop.f32.mrb[0].mxu0
    %v1767 = vadd.f32 0.0, %v1766
    %v1768 = vpop.f32.mrb[0].mxu0
    %1769 = vdwg.mxu0
    %v1770 = vld [vmem:[%s5] sm:$0x1]
    %v1772 = vlaneseq
    %v1773 = vshrl.u32 %v1772, 7
    %v1774 = vsub.s32 0, %v1773
    %v1775 = vrot.slane %v1770, %v1774
    %vm1777 = vcmask 130048
    %v1779 = vsel %vm1777, %v1679, 0
    %v1782 = vsel %vm1777, %v1680, 0
    %1784 = vmatprep.subr.mxu0 0.0
    %1785 = vmatpush1.msra.mxu0 %v1762
    %1786 = vmatprep.subr.mxu0 0.0
    %1787 = vmatpush1.msra.mxu0 %v1767
    %1788 = vmatprep.subr.mxu0 0.0
    %1789 = vmatpush1.msra.mxu0 0.0
    %1790 = vmatprep.subr.mxu0 0.0
    %1791 = vmatpush1.msra.mxu0 0.0
    %1792 = vmatprep.subr.mxu0 0.0
    %1793 = vmatpush1.msra.mxu0 0.0
    %1794 = vmatprep.subr.mxu0 0.0
    %1795 = vmatpush1.msra.mxu0 0.0
    %1796 = vmatprep.subr.mxu0 0.0
    %1797 = vmatpush1.msra.mxu0 0.0
    %1798 = vmatprep.subr.mxu0 0.0
    %1799 = vmatpush1.msra.mxu0 0.0
    %1800 = vmatprep.subr.mxu0 0.0
    %1801 = vmatpush1.msra.mxu0 0.0
    %1802 = vmatprep.subr.mxu0 0.0
    %1803 = vmatpush1.msra.mxu0 0.0
    %1804 = vmatprep.subr.mxu0 0.0
    %1805 = vmatpush1.msra.mxu0 0.0
    %1806 = vmatprep.subr.mxu0 0.0
    %1807 = vmatpush1.msra.mxu0 0.0
    %1808 = vmatprep.subr.mxu0 0.0
    %1809 = vmatpush1.msra.mxu0 0.0
    %1810 = vmatprep.subr.mxu0 0.0
    %1811 = vmatpush1.msra.mxu0 0.0
    %1812 = vmatprep.subr.mxu0 0.0
    %1813 = vmatpush1.msra.mxu0 0.0
    %1814 = vmatprep.subr.mxu0 0.0
    %1815 = vmatpush1.msra.mxu0 0.0
    %1816 = vmatprep.subr.mxu0 0.0
    %1817 = vmatpush1.msra.mxu0 0.0
    %1818 = vmatprep.subr.mxu0 0.0
    %1819 = vmatpush1.msra.mxu0 0.0
    %1820 = vmatprep.subr.mxu0 0.0
    %1821 = vmatpush1.msra.mxu0 0.0
    %1822 = vmatprep.subr.mxu0 0.0
    %1823 = vmatpush1.msra.mxu0 0.0
    %1824 = vmatprep.subr.mxu0 0.0
    %1825 = vmatpush1.msra.mxu0 0.0
    %1826 = vmatprep.subr.mxu0 0.0
    %1827 = vmatpush1.msra.mxu0 0.0
    %1828 = vmatprep.subr.mxu0 0.0
    %1829 = vmatpush1.msra.mxu0 0.0
    %1830 = vmatprep.subr.mxu0 0.0
    %1831 = vmatpush1.msra.mxu0 0.0
    %1832 = vmatprep.subr.mxu0 0.0
    %1833 = vmatpush1.msra.mxu0 0.0
    %1834 = vmatprep.subr.mxu0 0.0
    %1835 = vmatpush1.msra.mxu0 0.0
    %1836 = vmatprep.subr.mxu0 0.0
    %1837 = vmatpush1.msra.mxu0 0.0
    %1838 = vmatprep.subr.mxu0 0.0
    %1839 = vmatpush1.msra.mxu0 0.0
    %1840 = vmatprep.subr.mxu0 0.0
    %1841 = vmatpush1.msra.mxu0 0.0
    %1842 = vmatprep.subr.mxu0 0.0
    %1843 = vmatpush1.msra.mxu0 0.0
    %1844 = vmatprep.subr.mxu0 0.0
    %1845 = vmatpush1.msra.mxu0 0.0
    %1846 = vmatprep.subr.mxu0 0.0
    %1847 = vmatpush1.msra.mxu0 0.0
    %1848 = vmatprep.mubr.f32.mxu0 0.0
    %1849 = vmatmul.mubr.f32.gmra.mrb[0].mxu0 %v1779
    %v1850 = vpop.f32.mrb[0].mxu0
    %v1851 = vadd.f32 %v1775, %v1850
    %v1852 = vpop.f32.mrb[0].mxu0
    %1853 = vmatprep.mubr.f32.mxu0 0.0
    %1854 = vmatmul.mubr.f32.gmra.mrb[0].mxu0 %v1782
    %v1855 = vpop.f32.mrb[0].mxu0
    %v1856 = vadd.f32 %v1775, %v1855
    %v1857 = vpop.f32.mrb[0].mxu0
    %1858 = vdwg.mxu0
    %v1859 = vmax.f32 %v1851, 0.0
    %v1860 = vmax.f32 %v1856, 0.0
    %v1861 = vld [vmem:[#allocation8] sm:$0xff]
    %v1862 = vld [vmem:[#allocation8 + $0x8] sm:$0xff]
    %v1863 = vld [vmem:[#allocation8 + $0x10] sm:$0xff]
    %v1864 = vld [vmem:[#allocation8 + $0x18] sm:$0xff]
    %v1865 = vld [vmem:[#allocation8 + $0x20] sm:$0xff]
    %v1866 = vld [vmem:[#allocation8 + $0x28] sm:$0xff]
    %v1867 = vld [vmem:[#allocation8 + $0x30] sm:$0xff]
    %v1868 = vld [vmem:[#allocation8 + $0x38] sm:$0xff]
    %v1870 = vsel %vm200, %v1859, 0
    %v1873 = vsel %vm200, %v1860, 0
    %1875 = vmatprep.subr.mxu0 0.0
    %1876 = vmatpush1.msra.mxu0 %v1861
    %1877 = vmatprep.subr.mxu0 0.0
    %1878 = vmatpush1.msra.mxu0 %v1862
    %1879 = vmatprep.subr.mxu0 0.0
    %1880 = vmatpush1.msra.mxu0 %v1863
    %1881 = vmatprep.subr.mxu0 0.0
    %1882 = vmatpush1.msra.mxu0 %v1864
    %1883 = vmatprep.subr.mxu0 0.0
    %1884 = vmatpush1.msra.mxu0 %v1865
    %1885 = vmatprep.subr.mxu0 0.0
    %1886 = vmatpush1.msra.mxu0 %v1866
    %1887 = vmatprep.subr.mxu0 0.0
    %1888 = vmatpush1.msra.mxu0 %v1867
    %1889 = vmatprep.subr.mxu0 0.0
    %1890 = vmatpush1.msra.mxu0 %v1868
    %1891 = vmatprep.subr.mxu0 0.0
    %1892 = vmatpush1.msra.mxu0 0.0
    %1893 = vmatprep.subr.mxu0 0.0
    %1894 = vmatpush1.msra.mxu0 0.0
    %1895 = vmatprep.subr.mxu0 0.0
    %1896 = vmatpush1.msra.mxu0 0.0
    %1897 = vmatprep.subr.mxu0 0.0
    %1898 = vmatpush1.msra.mxu0 0.0
    %1899 = vmatprep.subr.mxu0 0.0
    %1900 = vmatpush1.msra.mxu0 0.0
    %1901 = vmatprep.subr.mxu0 0.0
    %1902 = vmatpush1.msra.mxu0 0.0
    %1903 = vmatprep.subr.mxu0 0.0
    %1904 = vmatpush1.msra.mxu0 0.0
    %1905 = vmatprep.subr.mxu0 0.0
    %1906 = vmatpush1.msra.mxu0 0.0
    %1907 = vmatprep.subr.mxu0 0.0
    %1908 = vmatpush1.msra.mxu0 0.0
    %1909 = vmatprep.subr.mxu0 0.0
    %1910 = vmatpush1.msra.mxu0 0.0
    %1911 = vmatprep.subr.mxu0 0.0
    %1912 = vmatpush1.msra.mxu0 0.0
    %1913 = vmatprep.subr.mxu0 0.0
    %1914 = vmatpush1.msra.mxu0 0.0
    %1915 = vmatprep.subr.mxu0 0.0
    %1916 = vmatpush1.msra.mxu0 0.0
    %1917 = vmatprep.subr.mxu0 0.0
    %1918 = vmatpush1.msra.mxu0 0.0
    %1919 = vmatprep.subr.mxu0 0.0
    %1920 = vmatpush1.msra.mxu0 0.0
    %1921 = vmatprep.subr.mxu0 0.0
    %1922 = vmatpush1.msra.mxu0 0.0
    %1923 = vmatprep.subr.mxu0 0.0
    %1924 = vmatpush1.msra.mxu0 0.0
    %1925 = vmatprep.subr.mxu0 0.0
    %1926 = vmatpush1.msra.mxu0 0.0
    %1927 = vmatprep.subr.mxu0 0.0
    %1928 = vmatpush1.msra.mxu0 0.0
    %1929 = vmatprep.subr.mxu0 0.0
    %1930 = vmatpush1.msra.mxu0 0.0
    %1931 = vmatprep.subr.mxu0 0.0
    %1932 = vmatpush1.msra.mxu0 0.0
    %1933 = vmatprep.subr.mxu0 0.0
    %1934 = vmatpush1.msra.mxu0 0.0
    %1935 = vmatprep.subr.mxu0 0.0
    %1936 = vmatpush1.msra.mxu0 0.0
    %1937 = vmatprep.subr.mxu0 0.0
    %1938 = vmatpush1.msra.mxu0 0.0
    %1939 = vmatprep.mubr.f32.mxu0 0.0
    %1940 = vmatmul.mubr.f32.gmra.mrb[0].mxu0 %v1870
    %v1941 = vpop.f32.mrb[0].mxu0
    %v1942 = vadd.f32 0.0, %v1941
    %v1943 = vpop.f32.mrb[0].mxu0
    %1944 = vmatprep.mubr.f32.mxu0 0.0
    %1945 = vmatmul.mubr.f32.gmra.mrb[0].mxu0 %v1873
    %v1946 = vpop.f32.mrb[0].mxu0
    %v1947 = vadd.f32 0.0, %v1946
    %v1948 = vpop.f32.mrb[0].mxu0
    %1949 = vdwg.mxu0
    %v1950 = vld [vmem:[%s7] sm:$0x1]
    %v1952 = vlaneseq
    %v1953 = vshrl.u32 %v1952, 7
    %v1954 = vsub.s32 0, %v1953
    %v1955 = vrot.slane %v1950, %v1954
    %1957 = vmatprep.subr.mxu0 0.0
    %1958 = vmatpush1.msra.mxu0 %v1942
    %1959 = vmatprep.subr.mxu0 0.0
    %1960 = vmatpush1.msra.mxu0 %v1947
    %1961 = vmatprep.subr.mxu0 0.0
    %1962 = vmatpush1.msra.mxu0 0.0
    %1963 = vmatprep.subr.mxu0 0.0
    %1964 = vmatpush1.msra.mxu0 0.0
    %1965 = vmatprep.subr.mxu0 0.0
    %1966 = vmatpush1.msra.mxu0 0.0
    %1967 = vmatprep.subr.mxu0 0.0
    %1968 = vmatpush1.msra.mxu0 0.0
    %1969 = vmatprep.subr.mxu0 0.0
    %1970 = vmatpush1.msra.mxu0 0.0
    %1971 = vmatprep.subr.mxu0 0.0
    %1972 = vmatpush1.msra.mxu0 0.0
    %1973 = vmatprep.subr.mxu0 0.0
    %1974 = vmatpush1.msra.mxu0 0.0
    %1975 = vmatprep.subr.mxu0 0.0
    %1976 = vmatpush1.msra.mxu0 0.0
    %1977 = vmatprep.subr.mxu0 0.0
    %1978 = vmatpush1.msra.mxu0 0.0
    %1979 = vmatprep.subr.mxu0 0.0
    %1980 = vmatpush1.msra.mxu0 0.0
    %1981 = vmatprep.subr.mxu0 0.0
    %1982 = vmatpush1.msra.mxu0 0.0
    %1983 = vmatprep.subr.mxu0 0.0
    %1984 = vmatpush1.msra.mxu0 0.0
    %1985 = vmatprep.subr.mxu0 0.0
    %1986 = vmatpush1.msra.mxu0 0.0
    %1987 = vmatprep.subr.mxu0 0.0
    %1988 = vmatpush1.msra.mxu0 0.0
    %1989 = vmatprep.subr.mxu0 0.0
    %1990 = vmatpush1.msra.mxu0 0.0
    %1991 = vmatprep.subr.mxu0 0.0
    %1992 = vmatpush1.msra.mxu0 0.0
    %1993 = vmatprep.subr.mxu0 0.0
    %1994 = vmatpush1.msra.mxu0 0.0
    %1995 = vmatprep.subr.mxu0 0.0
    %1996 = vmatpush1.msra.mxu0 0.0
    %1997 = vmatprep.subr.mxu0 0.0
    %1998 = vmatpush1.msra.mxu0 0.0
    %1999 = vmatprep.subr.mxu0 0.0
    %2000 = vmatpush1.msra.mxu0 0.0
    %2001 = vmatprep.subr.mxu0 0.0
    %2002 = vmatpush1.msra.mxu0 0.0
    %2003 = vmatprep.subr.mxu0 0.0
    %2004 = vmatpush1.msra.mxu0 0.0
    %2005 = vmatprep.subr.mxu0 0.0
    %2006 = vmatpush1.msra.mxu0 0.0
    %2007 = vmatprep.subr.mxu0 0.0
    %2008 = vmatpush1.msra.mxu0 0.0
    %2009 = vmatprep.subr.mxu0 0.0
    %2010 = vmatpush1.msra.mxu0 0.0
    %2011 = vmatprep.subr.mxu0 0.0
    %2012 = vmatpush1.msra.mxu0 0.0
    %2013 = vmatprep.subr.mxu0 0.0
    %2014 = vmatpush1.msra.mxu0 0.0
    %2015 = vmatprep.subr.mxu0 0.0
    %2016 = vmatpush1.msra.mxu0 0.0
    %2017 = vmatprep.subr.mxu0 0.0
    %2018 = vmatpush1.msra.mxu0 0.0
    %2019 = vmatprep.subr.mxu0 0.0
    %2020 = vmatpush1.msra.mxu0 0.0
    %2021 = vmatprep.mubr.f32.mxu0 0.0
    %2022 = vmatmul.mubr.f32.gmra.mrb[0].mxu0 %v1779
    %v2023 = vpop.f32.mrb[0].mxu0
    %v2024 = vadd.f32 %v1955, %v2023
    %v2025 = vpop.f32.mrb[0].mxu0
    %2026 = vmatprep.mubr.f32.mxu0 0.0
    %2027 = vmatmul.mubr.f32.gmra.mrb[0].mxu0 %v1782
    %v2028 = vpop.f32.mrb[0].mxu0
    %v2029 = vadd.f32 %v1955, %v2028
    %v2030 = vpop.f32.mrb[0].mxu0
    %2031 = vdwg.mxu0
    %2032 = vst [vmem:[%s8] sm:$0xff] %v2024
    %2033 = vst [vmem:[%s8 + $0x8] sm:$0xff] %v2029
    // Predicated region
    $region50: #{gcn_lstm_forward.1} parent=1 // pred_check
      _
    $region51: #{gcn_lstm_forward.1} parent=1 // pred_check_branch
      %2035 = sbr.rel (0) target = $region53
    $region52: #{gcn_lstm_forward.1} parent=1 // pred_region
      _
    $region53: #{gcn_lstm_forward.1} parent=1 // pred_fallthru
      _
    // Predicated region
    $region54: #{gcn_lstm_forward.1} parent=1 // pred_check
      _
    $region55: #{gcn_lstm_forward.1} parent=1 // pred_check_branch
      %2037 = sbr.rel (0) target = $region57
    $region56: #{gcn_lstm_forward.1} parent=1 // pred_region
      _
    $region57: #{gcn_lstm_forward.1} parent=1 // pred_fallthru
      _
    %2038 = vsyncpa [#allocation4], 1
    %2039 = vsyncpa [#allocation6], 1
    %2040 = vsyncpa [#allocation9], 1

</llo_original>
